<compile_context>
chip_gen: v7x
topology: tpu7x:2x2x1
jax: 0.10.0
libtpu: 0.0.40
codegen_flags: <defaults>
</compile_context>

<pallas_src>
import functools

import jax
import jax.numpy as jnp
from jax import lax
from jax.experimental import pallas as pl
from jax.experimental.pallas import tpu as pltpu

NEG_SLOPE = 0.2   # nn.LeakyReLU(neg_slope=0.2) from act('leakyrelu')
LN_EPS = 1e-5     # nn.LayerNorm default eps


# --------------------------------------------------------------- kernel -----

def _fused_block_kernel(x_ref, mask_ref, w0_ref, b0_ref, g0_ref, be0_ref,
                        w1_ref, b1_ref, g1_ref, be1_ref, w2_ref, b2_ref,
                        o_ref, *, W, block_n, cout):
    """Fully fused NoiseEncoderBlock for `block_n` samples.

    x_ref:            (block_n, Cin, P)   input, P = H*W lane-dense
    mask_ref:         (9, P)              per-tap zero-padding masks ({0,1})
    w0_ref:           (9*Cout, Cin)       stage-0 weight, tap-major rows
    b0_ref:           (Cout, 1)
    g0_ref / be0_ref: (Cout, P)           LayerNorm-0 gamma / beta
    w1_ref:           (9*Cout, Cout)      stage-1 weight, tap-major rows
    b1_ref:           (Cout, 1)
    g1_ref / be1_ref: (Cout, P)           LayerNorm-1 gamma / beta
    w2_ref:           (Cin, Cout)         1x1 conv weight
    b2_ref:           (Cin, 1)
    o_ref:            (block_n, Cin, P)
    """
    P = x_ref.shape[-1]
    masks = mask_ref[...]                       # (9, P)

    def conv3x3(h, w_ref):
        # h: (C, P). 3x3 conv with zero padding 1, done as 9 accumulated
        # matmuls over shifted views: xs[p] = h[p + s_tap] (0 off-image).
        acc = None
        for kh in range(3):
            for kw in range(3):
                t = kh * 3 + kw
                s = (kh - 1) * W + (kw - 1)     # flat source offset of this tap
                if s == 0:
                    xs = h                      # center tap: no shift, no mask
                else:
                    # circular lane roll (XLU) + zeroing of wrapped positions
                    xs = pltpu.roll(h, shift=(-s) % P, axis=1) * masks[t:t + 1, :]
                part = jnp.dot(w_ref[t * cout:(t + 1) * cout, :], xs,
                               preferred_element_type=jnp.float32)
                acc = part if acc is None else acc + part
        return acc

    def leaky_relu(y):
        return jnp.where(y >= 0, y, NEG_SLOPE * y)

    def layer_norm(y, gamma, beta):
        # LayerNorm over the WHOLE per-sample (Cout, P) == (C, H, W) slab.
        # NOTE: correctness relies on this slab never being tiled over Cout/P.
        inv_n = 1.0 / (y.shape[0] * y.shape[1])     # static const -> no divide
        row = jnp.sum(y, axis=1, keepdims=True)     # lane reduce  -> (Cout, 1)
        mean = jnp.sum(row, axis=0, keepdims=True) * inv_n          # (1, 1)
        cent = y - mean
        row2 = jnp.sum(cent * cent, axis=1, keepdims=True)
        var = jnp.sum(row2, axis=0, keepdims=True) * inv_n
        return cent * lax.rsqrt(var + LN_EPS) * gamma + beta        # rsqrt: EUP

    b0, b1, b2 = b0_ref[...], b1_ref[...], b2_ref[...]
    g0, be0 = g0_ref[...], be0_ref[...]
    g1, be1 = g1_ref[...], be1_ref[...]
    w2 = w2_ref[...]

    for n in range(block_n):                    # static unroll over samples
        x = x_ref[n]                            # (Cin, P)
        y = layer_norm(leaky_relu(conv3x3(x, w0_ref) + b0), g0, be0)
        y = layer_norm(leaky_relu(conv3x3(y, w1_ref) + b1), g1, be1)
        y = jnp.dot(w2, y, preferred_element_type=jnp.float32) + b2
        o_ref[n] = y.astype(o_ref.dtype)        # lane-dense, unmasked store


# -------------------------------------------------------------- wrapper -----

def _weight_norm(v, g):
    """PyTorch weight_norm(dim=0): w = g * v / ||v||, norm over dims 1.."""
    norm = jnp.sqrt(jnp.sum(v * v, axis=tuple(range(1, v.ndim)), keepdims=True))
    return (g.reshape((-1,) + (1,) * (v.ndim - 1)) / norm) * v


def _tap_masks(H, W):
    """(9, H*W) {0,1} masks: 1 where tap (kh,kw) reads inside the image."""
    ii = jnp.arange(H).reshape(H, 1)
    jj = jnp.arange(W).reshape(1, W)
    rows = []
    for kh in range(3):
        for kw in range(3):
            ok = ((ii + kh - 1 >= 0) & (ii + kh - 1 < H) &
                  (jj + kw - 1 >= 0) & (jj + kw - 1 < W))
            rows.append(ok.reshape(H * W))
    return jnp.stack(rows, axis=0).astype(jnp.float32)


def noise_encoder_block(x, params, *, block_n=1):
    """NoiseEncoderBlock forward. x: (N, in_ch, H, W) -> (N, in_ch, H, W)."""
    N, cin, H, W = x.shape
    P = H * W
    assert N % block_n == 0, "block_n must divide the batch size"

    # Fold weight_norm (w = g * v / ||v||) once, in parameter space.
    w0 = _weight_norm(params["v0"], params["g0"])          # (Cout, Cin, 3, 3)
    w1 = _weight_norm(params["v1"], params["g1"])          # (Cout, Cout, 3, 3)
    w2 = _weight_norm(params["v2"], params["g2"])          # (Cin, Cout, 1, 1)
    cout = w0.shape[0]

    # Tap-major (t, Cout, C) flattened to 2-D so the kernel takes
    # 8-sublane-aligned static row slices per tap (t = kh*3 + kw).
    w0_t = jnp.transpose(w0, (2, 3, 0, 1)).reshape(9 * cout, cin)
    w1_t = jnp.transpose(w1, (2, 3, 0, 1)).reshape(9 * cout, cout)
    w2_m = w2.reshape(cin, cout)

    masks = _tap_masks(H, W)                               # (9, P)
    x_flat = x.reshape(N, cin, P)

    kernel = functools.partial(_fused_block_kernel, W=W, block_n=block_n,
                               cout=cout)
    const = lambda n: (0, 0)                               # weights never move

    out = pl.pallas_call(
        kernel,
        out_shape=jax.ShapeDtypeStruct((N, cin, P), jnp.float32),
        grid=(N // block_n,),
        in_specs=[
            pl.BlockSpec((block_n, cin, P), lambda n: (n, 0, 0)),   # x
            pl.BlockSpec((9, P), const),                            # tap masks
            pl.BlockSpec((9 * cout, cin), const),                   # w0
            pl.BlockSpec((cout, 1), const),                         # b0
            pl.BlockSpec((cout, P), const),                         # ln0 gamma
            pl.BlockSpec((cout, P), const),                         # ln0 beta
            pl.BlockSpec((9 * cout, cout), const),                  # w1
            pl.BlockSpec((cout, 1), const),                         # b1
            pl.BlockSpec((cout, P), const),                         # ln1 gamma
            pl.BlockSpec((cout, P), const),                         # ln1 beta
            pl.BlockSpec((cin, cout), const),                       # w2
            pl.BlockSpec((cin, 1), const),                          # b2
        ],
        out_specs=pl.BlockSpec((block_n, cin, P), lambda n: (n, 0, 0)),
        compiler_params=pltpu.CompilerParams(
            dimension_semantics=("parallel",)),
    )(x_flat, masks, w0_t, params["b0"].reshape(cout, 1),
      params["ln0_w"].reshape(cout, P), params["ln0_b"].reshape(cout, P),
      w1_t, params["b1"].reshape(cout, 1),
      params["ln1_w"].reshape(cout, P), params["ln1_b"].reshape(cout, P),
      w2_m, params["b2"].reshape(cin, 1))
    return out.reshape(N, cin, H, W)


# ----------------------------------------------------------- pure-JAX ref ---

def _ref_forward(x, params):
    def conv(x, w, b, pad):
        y = lax.conv_general_dilated(
            x, w, window_strides=(1, 1), padding=((pad, pad), (pad, pad)),
            dimension_numbers=("NCHW", "OIHW", "NCHW"),
            precision=lax.Precision.HIGHEST)
        return y + b[None, :, None, None]

    def lrelu(y):
        return jnp.where(y >= 0, y, NEG_SLOPE * y)

    def ln(y, gamma, beta):
        mean = jnp.mean(y, axis=(1, 2, 3), keepdims=True)
        var = jnp.mean((y - mean) ** 2, axis=(1, 2, 3), keepdims=True)
        return (y - mean) * lax.rsqrt(var + LN_EPS) * gamma[None] + beta[None]

    w0 = _weight_norm(params["v0"], params["g0"])
    w1 = _weight_norm(params["v1"], params["g1"])
    w2 = _weight_norm(params["v2"], params["g2"])
    y = ln(lrelu(conv(x, w0, params["b0"], 1)), params["ln0_w"], params["ln0_b"])
    y = ln(lrelu(conv(y, w1, params["b1"], 1)), params["ln1_w"], params["ln1_b"])
    return conv(y, w2, params["b2"], 0)


# ------------------------------------------------------------------ main ----

if __name__ == "__main__":
    N, in_ch, out_ch, H, W = 2, 4, 8, 16, 16   # H*W = 256 -> lane-dense
    f32 = jnp.float32

    key = jax.random.PRNGKey(0)
    ks = jax.random.split(key, 14)
    params = {
        "v0": 0.15 * jax.random.normal(ks[0], (out_ch, in_ch, 3, 3), f32),
        "g0": 1.0 + 0.1 * jax.random.normal(ks[1], (out_ch,), f32),
        "b0": 0.1 * jax.random.normal(ks[2], (out_ch,), f32),
        "ln0_w": 1.0 + 0.1 * jax.random.normal(ks[3], (out_ch, H, W), f32),
        "ln0_b": 0.1 * jax.random.normal(ks[4], (out_ch, H, W), f32),
        "v1": 0.15 * jax.random.normal(ks[5], (out_ch, out_ch, 3, 3), f32),
        "g1": 1.0 + 0.1 * jax.random.normal(ks[6], (out_ch,), f32),
        "b1": 0.1 * jax.random.normal(ks[7], (out_ch,), f32),
        "ln1_w": 1.0 + 0.1 * jax.random.normal(ks[8], (out_ch, H, W), f32),
        "ln1_b": 0.1 * jax.random.normal(ks[9], (out_ch, H, W), f32),
        "v2": 0.15 * jax.random.normal(ks[10], (in_ch, out_ch, 1, 1), f32),
        "g2": 1.0 + 0.1 * jax.random.normal(ks[11], (in_ch,), f32),
        "b2": 0.1 * jax.random.normal(ks[12], (in_ch,), f32),
    }
    x = jax.random.normal(ks[13], (N, in_ch, H, W), f32)

    fwd = jax.jit(noise_encoder_block, static_argnames=("block_n",))
    out = jax.block_until_ready(fwd(x, params))

    ref = _ref_forward(x, params)
    assert out.shape == (N, in_ch, H, W) and out.dtype == x.dtype
    max_err = float(jnp.max(jnp.abs(out - ref)))
    assert jnp.allclose(out, ref, atol=2e-4, rtol=2e-4), max_err

    print("KERNEL_OK")
</pallas_src>

<mosaic_0001>
module attributes {stable_mosaic.version = 11 : i64} {
  func.func @_fused_block_kernel(%arg0: i32, %arg1: memref<1x4x256xf32, #tpu.memory_space<vmem>>, %arg2: memref<9x256xf32, #tpu.memory_space<vmem>>, %arg3: memref<72x4xf32, #tpu.memory_space<vmem>>, %arg4: memref<8x1xf32, #tpu.memory_space<vmem>>, %arg5: memref<8x256xf32, #tpu.memory_space<vmem>>, %arg6: memref<8x256xf32, #tpu.memory_space<vmem>>, %arg7: memref<72x8xf32, #tpu.memory_space<vmem>>, %arg8: memref<8x1xf32, #tpu.memory_space<vmem>>, %arg9: memref<8x256xf32, #tpu.memory_space<vmem>>, %arg10: memref<8x256xf32, #tpu.memory_space<vmem>>, %arg11: memref<4x8xf32, #tpu.memory_space<vmem>>, %arg12: memref<4x1xf32, #tpu.memory_space<vmem>>, %arg13: memref<1x4x256xf32, #tpu.memory_space<vmem>>) attributes {dimension_semantics = [#tpu.dimension_semantics<parallel>], iteration_bounds = array<i64: 2>, scalar_prefetch = 0 : i64, scratch_operands = 0 : i64, tpu.core_type = #tpu.core_type<tc>, window_params = [{transform_indices = @transform_0, window_bounds = array<i64: 1, 4, 256>}, {pipeline_mode = #tpu.pipeline_mode<synchronous>, transform_indices = @transform_1, window_bounds = array<i64: 9, 256>}, {pipeline_mode = #tpu.pipeline_mode<synchronous>, transform_indices = @transform_2, window_bounds = array<i64: 72, 4>}, {pipeline_mode = #tpu.pipeline_mode<synchronous>, transform_indices = @transform_3, window_bounds = array<i64: 8, 1>}, {pipeline_mode = #tpu.pipeline_mode<synchronous>, transform_indices = @transform_4, window_bounds = array<i64: 8, 256>}, {pipeline_mode = #tpu.pipeline_mode<synchronous>, transform_indices = @transform_5, window_bounds = array<i64: 8, 256>}, {pipeline_mode = #tpu.pipeline_mode<synchronous>, transform_indices = @transform_6, window_bounds = array<i64: 72, 8>}, {pipeline_mode = #tpu.pipeline_mode<synchronous>, transform_indices = @transform_7, window_bounds = array<i64: 8, 1>}, {pipeline_mode = #tpu.pipeline_mode<synchronous>, transform_indices = @transform_8, window_bounds = array<i64: 8, 256>}, {pipeline_mode = #tpu.pipeline_mode<synchronous>, transform_indices = @transform_9, window_bounds = array<i64: 8, 256>}, {pipeline_mode = #tpu.pipeline_mode<synchronous>, transform_indices = @transform_10, window_bounds = array<i64: 4, 8>}, {pipeline_mode = #tpu.pipeline_mode<synchronous>, transform_indices = @transform_11, window_bounds = array<i64: 4, 1>}, {transform_indices = @transform_12, window_bounds = array<i64: 1, 4, 256>}]} {
    %c0 = arith.constant 0 : index
    %c0_0 = arith.constant 0 : index
    %0 = vector.load %arg2[%c0, %c0_0] : memref<9x256xf32, #tpu.memory_space<vmem>>, vector<9x256xf32>
    %c0_1 = arith.constant 0 : index
    %c0_2 = arith.constant 0 : index
    %1 = vector.load %arg4[%c0_1, %c0_2] : memref<8x1xf32, #tpu.memory_space<vmem>>, vector<8x1xf32>
    %c0_3 = arith.constant 0 : index
    %c0_4 = arith.constant 0 : index
    %2 = vector.load %arg8[%c0_3, %c0_4] : memref<8x1xf32, #tpu.memory_space<vmem>>, vector<8x1xf32>
    %c0_5 = arith.constant 0 : index
    %c0_6 = arith.constant 0 : index
    %3 = vector.load %arg12[%c0_5, %c0_6] : memref<4x1xf32, #tpu.memory_space<vmem>>, vector<4x1xf32>
    %c0_7 = arith.constant 0 : index
    %c0_8 = arith.constant 0 : index
    %4 = vector.load %arg5[%c0_7, %c0_8] : memref<8x256xf32, #tpu.memory_space<vmem>>, vector<8x256xf32>
    %c0_9 = arith.constant 0 : index
    %c0_10 = arith.constant 0 : index
    %5 = vector.load %arg6[%c0_9, %c0_10] : memref<8x256xf32, #tpu.memory_space<vmem>>, vector<8x256xf32>
    %c0_11 = arith.constant 0 : index
    %c0_12 = arith.constant 0 : index
    %6 = vector.load %arg9[%c0_11, %c0_12] : memref<8x256xf32, #tpu.memory_space<vmem>>, vector<8x256xf32>
    %c0_13 = arith.constant 0 : index
    %c0_14 = arith.constant 0 : index
    %7 = vector.load %arg10[%c0_13, %c0_14] : memref<8x256xf32, #tpu.memory_space<vmem>>, vector<8x256xf32>
    %c0_15 = arith.constant 0 : index
    %c0_16 = arith.constant 0 : index
    %8 = vector.load %arg11[%c0_15, %c0_16] : memref<4x8xf32, #tpu.memory_space<vmem>>, vector<4x8xf32>
    %c0_17 = arith.constant 0 : index
    %c0_18 = arith.constant 0 : index
    %c0_19 = arith.constant 0 : index
    %9 = vector.load %arg1[%c0_17, %c0_18, %c0_19] : memref<1x4x256xf32, #tpu.memory_space<vmem>>, vector<1x4x256xf32>
    %10 = vector.shape_cast %9 : vector<1x4x256xf32> to vector<4x256xf32>
    %c17_i32 = arith.constant 17 : i32
    %11 = tpu.dynamic_rotate %10 by %c17_i32 dim 1 : vector<4x256xf32>, i32 -> vector<4x256xf32>
    %12 = vector.extract_strided_slice %0 {offsets = [0, 0], sizes = [1, 256], strides = [1, 1]} : vector<9x256xf32> to vector<1x256xf32>
    %13 = vector.broadcast %12 : vector<1x256xf32> to vector<4x256xf32>
    %14 = arith.mulf %11, %13 : vector<4x256xf32>
    %c0_20 = arith.constant 0 : index
    %c0_21 = arith.constant 0 : index
    %15 = vector.load %arg3[%c0_20, %c0_21] : memref<72x4xf32, #tpu.memory_space<vmem>>, vector<8x4xf32>
    %cst = arith.constant dense<0.000000e+00> : vector<8x256xf32>
    %16 = tpu.matmul %15, %14, %cst {dimension_numbers = #tpu.dot_dimension_numbers<[1], [0], [0], [1], [0, 0, 1, 1], [], []>} : vector<8x4xf32>, vector<4x256xf32>, vector<8x256xf32> -> vector<8x256xf32>
    %c16_i32 = arith.constant 16 : i32
    %17 = tpu.dynamic_rotate %10 by %c16_i32 dim 1 : vector<4x256xf32>, i32 -> vector<4x256xf32>
    %18 = vector.extract_strided_slice %0 {offsets = [1, 0], sizes = [1, 256], strides = [1, 1]} : vector<9x256xf32> to vector<1x256xf32>
    %19 = vector.broadcast %18 : vector<1x256xf32> to vector<4x256xf32>
    %20 = arith.mulf %17, %19 : vector<4x256xf32>
    %c8 = arith.constant 8 : index
    %c0_22 = arith.constant 0 : index
    %21 = vector.load %arg3[%c8, %c0_22] : memref<72x4xf32, #tpu.memory_space<vmem>>, vector<8x4xf32>
    %cst_23 = arith.constant dense<0.000000e+00> : vector<8x256xf32>
    %22 = tpu.matmul %21, %20, %cst_23 {dimension_numbers = #tpu.dot_dimension_numbers<[1], [0], [0], [1], [0, 0, 1, 1], [], []>} : vector<8x4xf32>, vector<4x256xf32>, vector<8x256xf32> -> vector<8x256xf32>
    %23 = arith.addf %16, %22 : vector<8x256xf32>
    %c15_i32 = arith.constant 15 : i32
    %24 = tpu.dynamic_rotate %10 by %c15_i32 dim 1 : vector<4x256xf32>, i32 -> vector<4x256xf32>
    %25 = vector.extract_strided_slice %0 {offsets = [2, 0], sizes = [1, 256], strides = [1, 1]} : vector<9x256xf32> to vector<1x256xf32>
    %26 = vector.broadcast %25 : vector<1x256xf32> to vector<4x256xf32>
    %27 = arith.mulf %24, %26 : vector<4x256xf32>
    %c16 = arith.constant 16 : index
    %c0_24 = arith.constant 0 : index
    %28 = vector.load %arg3[%c16, %c0_24] : memref<72x4xf32, #tpu.memory_space<vmem>>, vector<8x4xf32>
    %cst_25 = arith.constant dense<0.000000e+00> : vector<8x256xf32>
    %29 = tpu.matmul %28, %27, %cst_25 {dimension_numbers = #tpu.dot_dimension_numbers<[1], [0], [0], [1], [0, 0, 1, 1], [], []>} : vector<8x4xf32>, vector<4x256xf32>, vector<8x256xf32> -> vector<8x256xf32>
    %30 = arith.addf %23, %29 : vector<8x256xf32>
    %c1_i32 = arith.constant 1 : i32
    %31 = tpu.dynamic_rotate %10 by %c1_i32 dim 1 : vector<4x256xf32>, i32 -> vector<4x256xf32>
    %32 = vector.extract_strided_slice %0 {offsets = [3, 0], sizes = [1, 256], strides = [1, 1]} : vector<9x256xf32> to vector<1x256xf32>
    %33 = vector.broadcast %32 : vector<1x256xf32> to vector<4x256xf32>
    %34 = arith.mulf %31, %33 : vector<4x256xf32>
    %c24 = arith.constant 24 : index
    %c0_26 = arith.constant 0 : index
    %35 = vector.load %arg3[%c24, %c0_26] : memref<72x4xf32, #tpu.memory_space<vmem>>, vector<8x4xf32>
    %cst_27 = arith.constant dense<0.000000e+00> : vector<8x256xf32>
    %36 = tpu.matmul %35, %34, %cst_27 {dimension_numbers = #tpu.dot_dimension_numbers<[1], [0], [0], [1], [0, 0, 1, 1], [], []>} : vector<8x4xf32>, vector<4x256xf32>, vector<8x256xf32> -> vector<8x256xf32>
    %37 = arith.addf %30, %36 : vector<8x256xf32>
    %c32 = arith.constant 32 : index
    %c0_28 = arith.constant 0 : index
    %38 = vector.load %arg3[%c32, %c0_28] : memref<72x4xf32, #tpu.memory_space<vmem>>, vector<8x4xf32>
    %cst_29 = arith.constant dense<0.000000e+00> : vector<8x256xf32>
    %39 = tpu.matmul %38, %10, %cst_29 {dimension_numbers = #tpu.dot_dimension_numbers<[1], [0], [0], [1], [0, 0, 1, 1], [], []>} : vector<8x4xf32>, vector<4x256xf32>, vector<8x256xf32> -> vector<8x256xf32>
    %40 = arith.addf %37, %39 : vector<8x256xf32>
    %c255_i32 = arith.constant 255 : i32
    %41 = tpu.dynamic_rotate %10 by %c255_i32 dim 1 : vector<4x256xf32>, i32 -> vector<4x256xf32>
    %42 = vector.extract_strided_slice %0 {offsets = [5, 0], sizes = [1, 256], strides = [1, 1]} : vector<9x256xf32> to vector<1x256xf32>
    %43 = vector.broadcast %42 : vector<1x256xf32> to vector<4x256xf32>
    %44 = arith.mulf %41, %43 : vector<4x256xf32>
    %c40 = arith.constant 40 : index
    %c0_30 = arith.constant 0 : index
    %45 = vector.load %arg3[%c40, %c0_30] : memref<72x4xf32, #tpu.memory_space<vmem>>, vector<8x4xf32>
    %cst_31 = arith.constant dense<0.000000e+00> : vector<8x256xf32>
    %46 = tpu.matmul %45, %44, %cst_31 {dimension_numbers = #tpu.dot_dimension_numbers<[1], [0], [0], [1], [0, 0, 1, 1], [], []>} : vector<8x4xf32>, vector<4x256xf32>, vector<8x256xf32> -> vector<8x256xf32>
    %47 = arith.addf %40, %46 : vector<8x256xf32>
    %c241_i32 = arith.constant 241 : i32
    %48 = tpu.dynamic_rotate %10 by %c241_i32 dim 1 : vector<4x256xf32>, i32 -> vector<4x256xf32>
    %49 = vector.extract_strided_slice %0 {offsets = [6, 0], sizes = [1, 256], strides = [1, 1]} : vector<9x256xf32> to vector<1x256xf32>
    %50 = vector.broadcast %49 : vector<1x256xf32> to vector<4x256xf32>
    %51 = arith.mulf %48, %50 : vector<4x256xf32>
    %c48 = arith.constant 48 : index
    %c0_32 = arith.constant 0 : index
    %52 = vector.load %arg3[%c48, %c0_32] : memref<72x4xf32, #tpu.memory_space<vmem>>, vector<8x4xf32>
    %cst_33 = arith.constant dense<0.000000e+00> : vector<8x256xf32>
    %53 = tpu.matmul %52, %51, %cst_33 {dimension_numbers = #tpu.dot_dimension_numbers<[1], [0], [0], [1], [0, 0, 1, 1], [], []>} : vector<8x4xf32>, vector<4x256xf32>, vector<8x256xf32> -> vector<8x256xf32>
    %54 = arith.addf %47, %53 : vector<8x256xf32>
    %c240_i32 = arith.constant 240 : i32
    %55 = tpu.dynamic_rotate %10 by %c240_i32 dim 1 : vector<4x256xf32>, i32 -> vector<4x256xf32>
    %56 = vector.extract_strided_slice %0 {offsets = [7, 0], sizes = [1, 256], strides = [1, 1]} : vector<9x256xf32> to vector<1x256xf32>
    %57 = vector.broadcast %56 : vector<1x256xf32> to vector<4x256xf32>
    %58 = arith.mulf %55, %57 : vector<4x256xf32>
    %c56 = arith.constant 56 : index
    %c0_34 = arith.constant 0 : index
    %59 = vector.load %arg3[%c56, %c0_34] : memref<72x4xf32, #tpu.memory_space<vmem>>, vector<8x4xf32>
    %cst_35 = arith.constant dense<0.000000e+00> : vector<8x256xf32>
    %60 = tpu.matmul %59, %58, %cst_35 {dimension_numbers = #tpu.dot_dimension_numbers<[1], [0], [0], [1], [0, 0, 1, 1], [], []>} : vector<8x4xf32>, vector<4x256xf32>, vector<8x256xf32> -> vector<8x256xf32>
    %61 = arith.addf %54, %60 : vector<8x256xf32>
    %c239_i32 = arith.constant 239 : i32
    %62 = tpu.dynamic_rotate %10 by %c239_i32 dim 1 : vector<4x256xf32>, i32 -> vector<4x256xf32>
    %63 = vector.extract_strided_slice %0 {offsets = [8, 0], sizes = [1, 256], strides = [1, 1]} : vector<9x256xf32> to vector<1x256xf32>
    %64 = vector.broadcast %63 : vector<1x256xf32> to vector<4x256xf32>
    %65 = arith.mulf %62, %64 : vector<4x256xf32>
    %c64 = arith.constant 64 : index
    %c0_36 = arith.constant 0 : index
    %66 = vector.load %arg3[%c64, %c0_36] : memref<72x4xf32, #tpu.memory_space<vmem>>, vector<8x4xf32>
    %cst_37 = arith.constant dense<0.000000e+00> : vector<8x256xf32>
    %67 = tpu.matmul %66, %65, %cst_37 {dimension_numbers = #tpu.dot_dimension_numbers<[1], [0], [0], [1], [0, 0, 1, 1], [], []>} : vector<8x4xf32>, vector<4x256xf32>, vector<8x256xf32> -> vector<8x256xf32>
    %68 = arith.addf %61, %67 : vector<8x256xf32>
    %69 = vector.broadcast %1 : vector<8x1xf32> to vector<8x256xf32>
    %70 = arith.addf %68, %69 : vector<8x256xf32>
    %cst_38 = arith.constant 0.000000e+00 : f32
    %71 = vector.broadcast %cst_38 : f32 to vector<8x256xf32>
    %72 = arith.cmpf oge, %70, %71 : vector<8x256xf32>
    %cst_39 = arith.constant 2.000000e-01 : f32
    %73 = vector.broadcast %cst_39 : f32 to vector<8x256xf32>
    %74 = arith.mulf %73, %70 : vector<8x256xf32>
    %75 = arith.select %72, %70, %74 : vector<8x256xi1>, vector<8x256xf32>
    %cst_40 = arith.constant dense<0.000000e+00> : vector<8xf32>
    %76 = vector.multi_reduction <add>, %75, %cst_40 [1] : vector<8x256xf32> to vector<8xf32>
    %77 = vector.shape_cast %76 : vector<8xf32> to vector<8x1xf32>
    %cst_41 = arith.constant dense<0.000000e+00> : vector<1xf32>
    %78 = vector.multi_reduction <add>, %77, %cst_41 [0] : vector<8x1xf32> to vector<1xf32>
    %79 = vector.shape_cast %78 : vector<1xf32> to vector<1x1xf32>
    %cst_42 = arith.constant 4.8828125E-4 : f32
    %80 = vector.broadcast %cst_42 : f32 to vector<1x1xf32>
    %81 = arith.mulf %79, %80 : vector<1x1xf32>
    %82 = vector.broadcast %81 : vector<1x1xf32> to vector<8x256xf32>
    %83 = arith.subf %75, %82 : vector<8x256xf32>
    %84 = arith.mulf %83, %83 : vector<8x256xf32>
    %cst_43 = arith.constant dense<0.000000e+00> : vector<8xf32>
    %85 = vector.multi_reduction <add>, %84, %cst_43 [1] : vector<8x256xf32> to vector<8xf32>
    %86 = vector.shape_cast %85 : vector<8xf32> to vector<8x1xf32>
    %cst_44 = arith.constant dense<0.000000e+00> : vector<1xf32>
    %87 = vector.multi_reduction <add>, %86, %cst_44 [0] : vector<8x1xf32> to vector<1xf32>
    %88 = vector.shape_cast %87 : vector<1xf32> to vector<1x1xf32>
    %cst_45 = arith.constant 4.8828125E-4 : f32
    %89 = vector.broadcast %cst_45 : f32 to vector<1x1xf32>
    %90 = arith.mulf %88, %89 : vector<1x1xf32>
    %cst_46 = arith.constant 9.99999974E-6 : f32
    %91 = vector.broadcast %cst_46 : f32 to vector<1x1xf32>
    %92 = arith.addf %90, %91 : vector<1x1xf32>
    %93 = math.rsqrt %92 : vector<1x1xf32>
    %94 = vector.broadcast %93 : vector<1x1xf32> to vector<8x256xf32>
    %95 = arith.mulf %83, %94 : vector<8x256xf32>
    %96 = arith.mulf %95, %4 : vector<8x256xf32>
    %97 = arith.addf %96, %5 : vector<8x256xf32>
    %c17_i32_47 = arith.constant 17 : i32
    %98 = tpu.dynamic_rotate %97 by %c17_i32_47 dim 1 : vector<8x256xf32>, i32 -> vector<8x256xf32>
    %99 = vector.extract_strided_slice %0 {offsets = [0, 0], sizes = [1, 256], strides = [1, 1]} : vector<9x256xf32> to vector<1x256xf32>
    %100 = vector.broadcast %99 : vector<1x256xf32> to vector<8x256xf32>
    %101 = arith.mulf %98, %100 : vector<8x256xf32>
    %c0_48 = arith.constant 0 : index
    %c0_49 = arith.constant 0 : index
    %102 = vector.load %arg7[%c0_48, %c0_49] : memref<72x8xf32, #tpu.memory_space<vmem>>, vector<8x8xf32>
    %cst_50 = arith.constant dense<0.000000e+00> : vector<8x256xf32>
    %103 = tpu.matmul %102, %101, %cst_50 {dimension_numbers = #tpu.dot_dimension_numbers<[1], [0], [0], [1], [0, 0, 1, 1], [], []>} : vector<8x8xf32>, vector<8x256xf32>, vector<8x256xf32> -> vector<8x256xf32>
    %c16_i32_51 = arith.constant 16 : i32
    %104 = tpu.dynamic_rotate %97 by %c16_i32_51 dim 1 : vector<8x256xf32>, i32 -> vector<8x256xf32>
    %105 = vector.extract_strided_slice %0 {offsets = [1, 0], sizes = [1, 256], strides = [1, 1]} : vector<9x256xf32> to vector<1x256xf32>
    %106 = vector.broadcast %105 : vector<1x256xf32> to vector<8x256xf32>
    %107 = arith.mulf %104, %106 : vector<8x256xf32>
    %c8_52 = arith.constant 8 : index
    %c0_53 = arith.constant 0 : index
    %108 = vector.load %arg7[%c8_52, %c0_53] : memref<72x8xf32, #tpu.memory_space<vmem>>, vector<8x8xf32>
    %cst_54 = arith.constant dense<0.000000e+00> : vector<8x256xf32>
    %109 = tpu.matmul %108, %107, %cst_54 {dimension_numbers = #tpu.dot_dimension_numbers<[1], [0], [0], [1], [0, 0, 1, 1], [], []>} : vector<8x8xf32>, vector<8x256xf32>, vector<8x256xf32> -> vector<8x256xf32>
    %110 = arith.addf %103, %109 : vector<8x256xf32>
    %c15_i32_55 = arith.constant 15 : i32
    %111 = tpu.dynamic_rotate %97 by %c15_i32_55 dim 1 : vector<8x256xf32>, i32 -> vector<8x256xf32>
    %112 = vector.extract_strided_slice %0 {offsets = [2, 0], sizes = [1, 256], strides = [1, 1]} : vector<9x256xf32> to vector<1x256xf32>
    %113 = vector.broadcast %112 : vector<1x256xf32> to vector<8x256xf32>
    %114 = arith.mulf %111, %113 : vector<8x256xf32>
    %c16_56 = arith.constant 16 : index
    %c0_57 = arith.constant 0 : index
    %115 = vector.load %arg7[%c16_56, %c0_57] : memref<72x8xf32, #tpu.memory_space<vmem>>, vector<8x8xf32>
    %cst_58 = arith.constant dense<0.000000e+00> : vector<8x256xf32>
    %116 = tpu.matmul %115, %114, %cst_58 {dimension_numbers = #tpu.dot_dimension_numbers<[1], [0], [0], [1], [0, 0, 1, 1], [], []>} : vector<8x8xf32>, vector<8x256xf32>, vector<8x256xf32> -> vector<8x256xf32>
    %117 = arith.addf %110, %116 : vector<8x256xf32>
    %c1_i32_59 = arith.constant 1 : i32
    %118 = tpu.dynamic_rotate %97 by %c1_i32_59 dim 1 : vector<8x256xf32>, i32 -> vector<8x256xf32>
    %119 = vector.extract_strided_slice %0 {offsets = [3, 0], sizes = [1, 256], strides = [1, 1]} : vector<9x256xf32> to vector<1x256xf32>
    %120 = vector.broadcast %119 : vector<1x256xf32> to vector<8x256xf32>
    %121 = arith.mulf %118, %120 : vector<8x256xf32>
    %c24_60 = arith.constant 24 : index
    %c0_61 = arith.constant 0 : index
    %122 = vector.load %arg7[%c24_60, %c0_61] : memref<72x8xf32, #tpu.memory_space<vmem>>, vector<8x8xf32>
    %cst_62 = arith.constant dense<0.000000e+00> : vector<8x256xf32>
    %123 = tpu.matmul %122, %121, %cst_62 {dimension_numbers = #tpu.dot_dimension_numbers<[1], [0], [0], [1], [0, 0, 1, 1], [], []>} : vector<8x8xf32>, vector<8x256xf32>, vector<8x256xf32> -> vector<8x256xf32>
    %124 = arith.addf %117, %123 : vector<8x256xf32>
    %c32_63 = arith.constant 32 : index
    %c0_64 = arith.constant 0 : index
    %125 = vector.load %arg7[%c32_63, %c0_64] : memref<72x8xf32, #tpu.memory_space<vmem>>, vector<8x8xf32>
    %cst_65 = arith.constant dense<0.000000e+00> : vector<8x256xf32>
    %126 = tpu.matmul %125, %97, %cst_65 {dimension_numbers = #tpu.dot_dimension_numbers<[1], [0], [0], [1], [0, 0, 1, 1], [], []>} : vector<8x8xf32>, vector<8x256xf32>, vector<8x256xf32> -> vector<8x256xf32>
    %127 = arith.addf %124, %126 : vector<8x256xf32>
    %c255_i32_66 = arith.constant 255 : i32
    %128 = tpu.dynamic_rotate %97 by %c255_i32_66 dim 1 : vector<8x256xf32>, i32 -> vector<8x256xf32>
    %129 = vector.extract_strided_slice %0 {offsets = [5, 0], sizes = [1, 256], strides = [1, 1]} : vector<9x256xf32> to vector<1x256xf32>
    %130 = vector.broadcast %129 : vector<1x256xf32> to vector<8x256xf32>
    %131 = arith.mulf %128, %130 : vector<8x256xf32>
    %c40_67 = arith.constant 40 : index
    %c0_68 = arith.constant 0 : index
    %132 = vector.load %arg7[%c40_67, %c0_68] : memref<72x8xf32, #tpu.memory_space<vmem>>, vector<8x8xf32>
    %cst_69 = arith.constant dense<0.000000e+00> : vector<8x256xf32>
    %133 = tpu.matmul %132, %131, %cst_69 {dimension_numbers = #tpu.dot_dimension_numbers<[1], [0], [0], [1], [0, 0, 1, 1], [], []>} : vector<8x8xf32>, vector<8x256xf32>, vector<8x256xf32> -> vector<8x256xf32>
    %134 = arith.addf %127, %133 : vector<8x256xf32>
    %c241_i32_70 = arith.constant 241 : i32
    %135 = tpu.dynamic_rotate %97 by %c241_i32_70 dim 1 : vector<8x256xf32>, i32 -> vector<8x256xf32>
    %136 = vector.extract_strided_slice %0 {offsets = [6, 0], sizes = [1, 256], strides = [1, 1]} : vector<9x256xf32> to vector<1x256xf32>
    %137 = vector.broadcast %136 : vector<1x256xf32> to vector<8x256xf32>
    %138 = arith.mulf %135, %137 : vector<8x256xf32>
    %c48_71 = arith.constant 48 : index
    %c0_72 = arith.constant 0 : index
    %139 = vector.load %arg7[%c48_71, %c0_72] : memref<72x8xf32, #tpu.memory_space<vmem>>, vector<8x8xf32>
    %cst_73 = arith.constant dense<0.000000e+00> : vector<8x256xf32>
    %140 = tpu.matmul %139, %138, %cst_73 {dimension_numbers = #tpu.dot_dimension_numbers<[1], [0], [0], [1], [0, 0, 1, 1], [], []>} : vector<8x8xf32>, vector<8x256xf32>, vector<8x256xf32> -> vector<8x256xf32>
    %141 = arith.addf %134, %140 : vector<8x256xf32>
    %c240_i32_74 = arith.constant 240 : i32
    %142 = tpu.dynamic_rotate %97 by %c240_i32_74 dim 1 : vector<8x256xf32>, i32 -> vector<8x256xf32>
    %143 = vector.extract_strided_slice %0 {offsets = [7, 0], sizes = [1, 256], strides = [1, 1]} : vector<9x256xf32> to vector<1x256xf32>
    %144 = vector.broadcast %143 : vector<1x256xf32> to vector<8x256xf32>
    %145 = arith.mulf %142, %144 : vector<8x256xf32>
    %c56_75 = arith.constant 56 : index
    %c0_76 = arith.constant 0 : index
    %146 = vector.load %arg7[%c56_75, %c0_76] : memref<72x8xf32, #tpu.memory_space<vmem>>, vector<8x8xf32>
    %cst_77 = arith.constant dense<0.000000e+00> : vector<8x256xf32>
    %147 = tpu.matmul %146, %145, %cst_77 {dimension_numbers = #tpu.dot_dimension_numbers<[1], [0], [0], [1], [0, 0, 1, 1], [], []>} : vector<8x8xf32>, vector<8x256xf32>, vector<8x256xf32> -> vector<8x256xf32>
    %148 = arith.addf %141, %147 : vector<8x256xf32>
    %c239_i32_78 = arith.constant 239 : i32
    %149 = tpu.dynamic_rotate %97 by %c239_i32_78 dim 1 : vector<8x256xf32>, i32 -> vector<8x256xf32>
    %150 = vector.extract_strided_slice %0 {offsets = [8, 0], sizes = [1, 256], strides = [1, 1]} : vector<9x256xf32> to vector<1x256xf32>
    %151 = vector.broadcast %150 : vector<1x256xf32> to vector<8x256xf32>
    %152 = arith.mulf %149, %151 : vector<8x256xf32>
    %c64_79 = arith.constant 64 : index
    %c0_80 = arith.constant 0 : index
    %153 = vector.load %arg7[%c64_79, %c0_80] : memref<72x8xf32, #tpu.memory_space<vmem>>, vector<8x8xf32>
    %cst_81 = arith.constant dense<0.000000e+00> : vector<8x256xf32>
    %154 = tpu.matmul %153, %152, %cst_81 {dimension_numbers = #tpu.dot_dimension_numbers<[1], [0], [0], [1], [0, 0, 1, 1], [], []>} : vector<8x8xf32>, vector<8x256xf32>, vector<8x256xf32> -> vector<8x256xf32>
    %155 = arith.addf %148, %154 : vector<8x256xf32>
    %156 = vector.broadcast %2 : vector<8x1xf32> to vector<8x256xf32>
    %157 = arith.addf %155, %156 : vector<8x256xf32>
    %cst_82 = arith.constant 0.000000e+00 : f32
    %158 = vector.broadcast %cst_82 : f32 to vector<8x256xf32>
    %159 = arith.cmpf oge, %157, %158 : vector<8x256xf32>
    %cst_83 = arith.constant 2.000000e-01 : f32
    %160 = vector.broadcast %cst_83 : f32 to vector<8x256xf32>
    %161 = arith.mulf %160, %157 : vector<8x256xf32>
    %162 = arith.select %159, %157, %161 : vector<8x256xi1>, vector<8x256xf32>
    %cst_84 = arith.constant dense<0.000000e+00> : vector<8xf32>
    %163 = vector.multi_reduction <add>, %162, %cst_84 [1] : vector<8x256xf32> to vector<8xf32>
    %164 = vector.shape_cast %163 : vector<8xf32> to vector<8x1xf32>
    %cst_85 = arith.constant dense<0.000000e+00> : vector<1xf32>
    %165 = vector.multi_reduction <add>, %164, %cst_85 [0] : vector<8x1xf32> to vector<1xf32>
    %166 = vector.shape_cast %165 : vector<1xf32> to vector<1x1xf32>
    %cst_86 = arith.constant 4.8828125E-4 : f32
    %167 = vector.broadcast %cst_86 : f32 to vector<1x1xf32>
    %168 = arith.mulf %166, %167 : vector<1x1xf32>
    %169 = vector.broadcast %168 : vector<1x1xf32> to vector<8x256xf32>
    %170 = arith.subf %162, %169 : vector<8x256xf32>
    %171 = arith.mulf %170, %170 : vector<8x256xf32>
    %cst_87 = arith.constant dense<0.000000e+00> : vector<8xf32>
    %172 = vector.multi_reduction <add>, %171, %cst_87 [1] : vector<8x256xf32> to vector<8xf32>
    %173 = vector.shape_cast %172 : vector<8xf32> to vector<8x1xf32>
    %cst_88 = arith.constant dense<0.000000e+00> : vector<1xf32>
    %174 = vector.multi_reduction <add>, %173, %cst_88 [0] : vector<8x1xf32> to vector<1xf32>
    %175 = vector.shape_cast %174 : vector<1xf32> to vector<1x1xf32>
    %cst_89 = arith.constant 4.8828125E-4 : f32
    %176 = vector.broadcast %cst_89 : f32 to vector<1x1xf32>
    %177 = arith.mulf %175, %176 : vector<1x1xf32>
    %cst_90 = arith.constant 9.99999974E-6 : f32
    %178 = vector.broadcast %cst_90 : f32 to vector<1x1xf32>
    %179 = arith.addf %177, %178 : vector<1x1xf32>
    %180 = math.rsqrt %179 : vector<1x1xf32>
    %181 = vector.broadcast %180 : vector<1x1xf32> to vector<8x256xf32>
    %182 = arith.mulf %170, %181 : vector<8x256xf32>
    %183 = arith.mulf %182, %6 : vector<8x256xf32>
    %184 = arith.addf %183, %7 : vector<8x256xf32>
    %cst_91 = arith.constant dense<0.000000e+00> : vector<4x256xf32>
    %185 = tpu.matmul %8, %184, %cst_91 {dimension_numbers = #tpu.dot_dimension_numbers<[1], [0], [0], [1], [0, 0, 1, 1], [], []>} : vector<4x8xf32>, vector<8x256xf32>, vector<4x256xf32> -> vector<4x256xf32>
    %186 = vector.broadcast %3 : vector<4x1xf32> to vector<4x256xf32>
    %187 = arith.addf %185, %186 : vector<4x256xf32>
    %c0_92 = arith.constant 0 : index
    %c0_93 = arith.constant 0 : index
    %c0_94 = arith.constant 0 : index
    %188 = vector.load %arg13[%c0_92, %c0_93, %c0_94] : memref<1x4x256xf32, #tpu.memory_space<vmem>>, vector<1x4x256xf32>
    %189 = vector.shape_cast %188 : vector<1x4x256xf32> to vector<4x256xf32>
    %190 = vector.shape_cast %187 : vector<4x256xf32> to vector<1x4x256xf32>
    tpu.vector_store %arg13[%c0_92, %c0_93, %c0_94], %190 {strides = array<i32>} : memref<1x4x256xf32, #tpu.memory_space<vmem>>, vector<1x4x256xf32>,
    return
  }
  func.func @transform_0(%arg0: i32) -> (i32, i32, i32) {
    %c0_i32 = arith.constant 0 : i32
    %c0_i32_0 = arith.constant 0 : i32
    %c0_i32_1 = arith.constant 0 : i32
    return %arg0, %c0_i32, %c0_i32_0 : i32, i32, i32
  }
  func.func @transform_1(%arg0: i32) -> (i32, i32) {
    %c0_i32 = arith.constant 0 : i32
    %c0_i32_0 = arith.constant 0 : i32
    %c0_i32_1 = arith.constant 0 : i32
    return %c0_i32, %c0_i32_0 : i32, i32
  }
  func.func @transform_2(%arg0: i32) -> (i32, i32) {
    %c0_i32 = arith.constant 0 : i32
    %c0_i32_0 = arith.constant 0 : i32
    %c0_i32_1 = arith.constant 0 : i32
    return %c0_i32, %c0_i32_0 : i32, i32
  }
  func.func @transform_3(%arg0: i32) -> (i32, i32) {
    %c0_i32 = arith.constant 0 : i32
    %c0_i32_0 = arith.constant 0 : i32
    %c0_i32_1 = arith.constant 0 : i32
    return %c0_i32, %c0_i32_0 : i32, i32
  }
  func.func @transform_4(%arg0: i32) -> (i32, i32) {
    %c0_i32 = arith.constant 0 : i32
    %c0_i32_0 = arith.constant 0 : i32
    %c0_i32_1 = arith.constant 0 : i32
    return %c0_i32, %c0_i32_0 : i32, i32
  }
  func.func @transform_5(%arg0: i32) -> (i32, i32) {
    %c0_i32 = arith.constant 0 : i32
    %c0_i32_0 = arith.constant 0 : i32
    %c0_i32_1 = arith.constant 0 : i32
    return %c0_i32, %c0_i32_0 : i32, i32
  }
  func.func @transform_6(%arg0: i32) -> (i32, i32) {
    %c0_i32 = arith.constant 0 : i32
    %c0_i32_0 = arith.constant 0 : i32
    %c0_i32_1 = arith.constant 0 : i32
    return %c0_i32, %c0_i32_0 : i32, i32
  }
  func.func @transform_7(%arg0: i32) -> (i32, i32) {
    %c0_i32 = arith.constant 0 : i32
    %c0_i32_0 = arith.constant 0 : i32
    %c0_i32_1 = arith.constant 0 : i32
    return %c0_i32, %c0_i32_0 : i32, i32
  }
  func.func @transform_8(%arg0: i32) -> (i32, i32) {
    %c0_i32 = arith.constant 0 : i32
    %c0_i32_0 = arith.constant 0 : i32
    %c0_i32_1 = arith.constant 0 : i32
    return %c0_i32, %c0_i32_0 : i32, i32
  }
  func.func @transform_9(%arg0: i32) -> (i32, i32) {
    %c0_i32 = arith.constant 0 : i32
    %c0_i32_0 = arith.constant 0 : i32
    %c0_i32_1 = arith.constant 0 : i32
    return %c0_i32, %c0_i32_0 : i32, i32
  }
  func.func @transform_10(%arg0: i32) -> (i32, i32) {
    %c0_i32 = arith.constant 0 : i32
    %c0_i32_0 = arith.constant 0 : i32
    %c0_i32_1 = arith.constant 0 : i32
    return %c0_i32, %c0_i32_0 : i32, i32
  }
  func.func @transform_11(%arg0: i32) -> (i32, i32) {
    %c0_i32 = arith.constant 0 : i32
    %c0_i32_0 = arith.constant 0 : i32
    %c0_i32_1 = arith.constant 0 : i32
    return %c0_i32, %c0_i32_0 : i32, i32
  }
  func.func @transform_12(%arg0: i32) -> (i32, i32, i32) {
    %c0_i32 = arith.constant 0 : i32
    %c0_i32_0 = arith.constant 0 : i32
    %c0_i32_1 = arith.constant 0 : i32
    return %arg0, %c0_i32, %c0_i32_0 : i32, i32, i32
  }
}

</mosaic_0001>

<llo_original>
// kernel: noise_encoder_block.1
$region0: #{noise_encoder_block.1}
  #allocation0 [shape = 'u32[]', space=smem, size = 0x4, offset = 0x4, fixed_abs, tag = 'smem constant byte address 0x4 - core index']
  #allocation1 [shape = 'u32[144,128]{1,0:T(1,128)}', space=vmem, size = 0x12000, scoped, tag = 'internal scratch']
  %s0 = inlined_call_operand.vmem [shape: f32[2,4,256], index: 0, kind: input, shape index: {}]
  %s1 = inlined_call_operand.vmem [shape: f32[9,256], index: 1, kind: input, shape index: {}]
  %s2 = inlined_call_operand.vmem [shape: f32[72,4], index: 2, kind: input, shape index: {}]
  %s3 = inlined_call_operand.vmem [shape: f32[8,1], index: 3, kind: input, shape index: {}]
  %s4 = inlined_call_operand.vmem [shape: f32[8,256], index: 4, kind: input, shape index: {}]
  %s5 = inlined_call_operand.vmem [shape: f32[8,256], index: 5, kind: input, shape index: {}]
  %s6 = inlined_call_operand.vmem [shape: f32[72,8], index: 6, kind: input, shape index: {}]
  %s7 = inlined_call_operand.vmem [shape: f32[8,1], index: 7, kind: input, shape index: {}]
  %s8 = inlined_call_operand.vmem [shape: f32[8,256], index: 8, kind: input, shape index: {}]
  %s9 = inlined_call_operand.vmem [shape: f32[8,256], index: 9, kind: input, shape index: {}]
  %s10 = inlined_call_operand.vmem [shape: f32[4,8], index: 10, kind: input, shape index: {}]
  %s11 = inlined_call_operand.vmem [shape: f32[4,1], index: 11, kind: input, shape index: {}]
  %s12 = inlined_call_operand.vmem [shape: f32[2,4,256], index: 12, kind: output, shape index: {}]
  %s13 = sld [smem:[#allocation0]]
  $region81: #{noise_encoder_block.1} parent=0
    _
  %s15 = ssub.s32 1, %s13
  %s16 = scalar_select 0, %s15, %s13
  loop: start=0, step=1, limit=4
  $region2: #{noise_encoder_block.1} parent=0 // loop_pre_header
    _
  $region3: #{noise_encoder_block.1} parent=0 // loop_header
    %s18 = sphi 0, %s22
    %p19 = scmp.ge.s32.totalorder %s18, 4
    %s28 = sphi 0, %s30
    %s31 = sphi 0, %s28
    %s32 = sphi 0, %s31
    %s48 = sphi 0, %s32
    %s52 = sphi 0, %s52
    %s54 = sphi 0, %s52
    %s55 = sphi 0, %s54
    %s69 = sphi 0, %s55
    %s73 = sphi 0, %s73
    %s75 = sphi 0, %s73
    %s76 = sphi 0, %s75
    %s90 = sphi 0, %s76
    %s94 = sphi 0, %s94
    %s96 = sphi 0, %s94
    %s97 = sphi 0, %s96
    %s111 = sphi 0, %s97
    %s115 = sphi 0, %s115
    %s117 = sphi 0, %s115
    %s118 = sphi 0, %s117
    %s132 = sphi 0, %s118
    %s136 = sphi 0, %s136
    %s138 = sphi 0, %s136
    %s139 = sphi 0, %s138
    %s153 = sphi 0, %s139
    %s157 = sphi 0, %s157
    %s159 = sphi 0, %s157
    %s160 = sphi 0, %s159
    %s174 = sphi 0, %s160
    %s178 = sphi 0, %s178
    %s180 = sphi 0, %s178
    %s181 = sphi 0, %s180
    %s195 = sphi 0, %s181
    %s199 = sphi 0, %s199
    %s201 = sphi 0, %s199
    %s202 = sphi 0, %s201
    %s216 = sphi 0, %s202
    %s220 = sphi 0, %s220
    %s222 = sphi 0, %s220
    %s223 = sphi 0, %s222
    %s237 = sphi 0, %s223
    %s241 = sphi 0, %s241
    %s243 = sphi 0, %s241
    %s244 = sphi 0, %s243
    %s258 = sphi 0, %s244
    %s262 = sphi 0, %s262
    %s264 = sphi 0, %s262
    %s265 = sphi 0, %s264
    %s279 = sphi 0, %s265
    %s285 = sphi 0, %s287
    %s288 = sphi 0, %s285
    %s289 = sphi 0, %s288
    %s305 = sphi 0, %s289
  $region4: #{noise_encoder_block.1} parent=0 // loop_header_branch
    %21 = sbr.rel (%p19) target = $region8
  $region5: #{noise_encoder_block.1} parent=0 // loop_body
    %s23 = ssub.s32 %s18, 1
    %s24 = ssub.s32 %s18, 2
    %s25 = sadd.s32 %s18, 1
    %s26 = ssub.s32 %s18, %s25
    %p27 = scmp.eq.s32.totalorder %s26, 0
    %s29 = sadd.s32 %s28, 1
    %s30 = scalar_select %p27, %s28, %s29
    %p33 = pneg %p27
    %p34 = scmp.eq.s32.totalorder %s18, 1
    %p35 = por %p33, %p34
    %p36 = scmp.ne.s32.totalorder %s28, %s31
    %p37 = scmp.eq.s32.totalorder %s18, 0
    %p38 = por %p36, %p37
    %p39 = scmp.ne.s32.totalorder %s28, %s31
    %p40 = scmp.eq.s32.totalorder %s23, 1
    %p41 = por %p39, %p40
    %p42 = scmp.ne.s32.totalorder %s31, %s32
    %p43 = scmp.eq.s32.totalorder %s23, 0
    %p44 = por %p42, %p43
    %p45 = scmp.ne.s32.totalorder %s31, %s32
    %p46 = scmp.eq.s32.totalorder %s24, 1
    %p47 = por %p45, %p46
    %p49 = scmp.ne.s32.totalorder %s32, %s48
    %p50 = scmp.eq.s32.totalorder %s24, 0
    %p51 = por %p49, %p50
    %s53 = sadd.s32 %s52, 1
    %p56 = scmp.eq.s32.totalorder %s18, 1
    %p57 = scmp.ne.s32.totalorder %s52, %s54
    %p58 = scmp.eq.s32.totalorder %s18, 0
    %p59 = por %p57, %p58
    %p60 = scmp.ne.s32.totalorder %s52, %s54
    %p61 = scmp.eq.s32.totalorder %s23, 1
    %p62 = por %p60, %p61
    %p63 = scmp.ne.s32.totalorder %s54, %s55
    %p64 = scmp.eq.s32.totalorder %s23, 0
    %p65 = por %p63, %p64
    %p66 = scmp.ne.s32.totalorder %s54, %s55
    %p67 = scmp.eq.s32.totalorder %s24, 1
    %p68 = por %p66, %p67
    %p70 = scmp.ne.s32.totalorder %s55, %s69
    %p71 = scmp.eq.s32.totalorder %s24, 0
    %p72 = por %p70, %p71
    %s74 = sadd.s32 %s73, 1
    %p77 = scmp.eq.s32.totalorder %s18, 1
    %p78 = scmp.ne.s32.totalorder %s73, %s75
    %p79 = scmp.eq.s32.totalorder %s18, 0
    %p80 = por %p78, %p79
    %p81 = scmp.ne.s32.totalorder %s73, %s75
    %p82 = scmp.eq.s32.totalorder %s23, 1
    %p83 = por %p81, %p82
    %p84 = scmp.ne.s32.totalorder %s75, %s76
    %p85 = scmp.eq.s32.totalorder %s23, 0
    %p86 = por %p84, %p85
    %p87 = scmp.ne.s32.totalorder %s75, %s76
    %p88 = scmp.eq.s32.totalorder %s24, 1
    %p89 = por %p87, %p88
    %p91 = scmp.ne.s32.totalorder %s76, %s90
    %p92 = scmp.eq.s32.totalorder %s24, 0
    %p93 = por %p91, %p92
    %s95 = sadd.s32 %s94, 1
    %p98 = scmp.eq.s32.totalorder %s18, 1
    %p99 = scmp.ne.s32.totalorder %s94, %s96
    %p100 = scmp.eq.s32.totalorder %s18, 0
    %p101 = por %p99, %p100
    %p102 = scmp.ne.s32.totalorder %s94, %s96
    %p103 = scmp.eq.s32.totalorder %s23, 1
    %p104 = por %p102, %p103
    %p105 = scmp.ne.s32.totalorder %s96, %s97
    %p106 = scmp.eq.s32.totalorder %s23, 0
    %p107 = por %p105, %p106
    %p108 = scmp.ne.s32.totalorder %s96, %s97
    %p109 = scmp.eq.s32.totalorder %s24, 1
    %p110 = por %p108, %p109
    %p112 = scmp.ne.s32.totalorder %s97, %s111
    %p113 = scmp.eq.s32.totalorder %s24, 0
    %p114 = por %p112, %p113
    %s116 = sadd.s32 %s115, 1
    %p119 = scmp.eq.s32.totalorder %s18, 1
    %p120 = scmp.ne.s32.totalorder %s115, %s117
    %p121 = scmp.eq.s32.totalorder %s18, 0
    %p122 = por %p120, %p121
    %p123 = scmp.ne.s32.totalorder %s115, %s117
    %p124 = scmp.eq.s32.totalorder %s23, 1
    %p125 = por %p123, %p124
    %p126 = scmp.ne.s32.totalorder %s117, %s118
    %p127 = scmp.eq.s32.totalorder %s23, 0
    %p128 = por %p126, %p127
    %p129 = scmp.ne.s32.totalorder %s117, %s118
    %p130 = scmp.eq.s32.totalorder %s24, 1
    %p131 = por %p129, %p130
    %p133 = scmp.ne.s32.totalorder %s118, %s132
    %p134 = scmp.eq.s32.totalorder %s24, 0
    %p135 = por %p133, %p134
    %s137 = sadd.s32 %s136, 1
    %p140 = scmp.eq.s32.totalorder %s18, 1
    %p141 = scmp.ne.s32.totalorder %s136, %s138
    %p142 = scmp.eq.s32.totalorder %s18, 0
    %p143 = por %p141, %p142
    %p144 = scmp.ne.s32.totalorder %s136, %s138
    %p145 = scmp.eq.s32.totalorder %s23, 1
    %p146 = por %p144, %p145
    %p147 = scmp.ne.s32.totalorder %s138, %s139
    %p148 = scmp.eq.s32.totalorder %s23, 0
    %p149 = por %p147, %p148
    %p150 = scmp.ne.s32.totalorder %s138, %s139
    %p151 = scmp.eq.s32.totalorder %s24, 1
    %p152 = por %p150, %p151
    %p154 = scmp.ne.s32.totalorder %s139, %s153
    %p155 = scmp.eq.s32.totalorder %s24, 0
    %p156 = por %p154, %p155
    %s158 = sadd.s32 %s157, 1
    %p161 = scmp.eq.s32.totalorder %s18, 1
    %p162 = scmp.ne.s32.totalorder %s157, %s159
    %p163 = scmp.eq.s32.totalorder %s18, 0
    %p164 = por %p162, %p163
    %p165 = scmp.ne.s32.totalorder %s157, %s159
    %p166 = scmp.eq.s32.totalorder %s23, 1
    %p167 = por %p165, %p166
    %p168 = scmp.ne.s32.totalorder %s159, %s160
    %p169 = scmp.eq.s32.totalorder %s23, 0
    %p170 = por %p168, %p169
    %p171 = scmp.ne.s32.totalorder %s159, %s160
    %p172 = scmp.eq.s32.totalorder %s24, 1
    %p173 = por %p171, %p172
    %p175 = scmp.ne.s32.totalorder %s160, %s174
    %p176 = scmp.eq.s32.totalorder %s24, 0
    %p177 = por %p175, %p176
    %s179 = sadd.s32 %s178, 1
    %p182 = scmp.eq.s32.totalorder %s18, 1
    %p183 = scmp.ne.s32.totalorder %s178, %s180
    %p184 = scmp.eq.s32.totalorder %s18, 0
    %p185 = por %p183, %p184
    %p186 = scmp.ne.s32.totalorder %s178, %s180
    %p187 = scmp.eq.s32.totalorder %s23, 1
    %p188 = por %p186, %p187
    %p189 = scmp.ne.s32.totalorder %s180, %s181
    %p190 = scmp.eq.s32.totalorder %s23, 0
    %p191 = por %p189, %p190
    %p192 = scmp.ne.s32.totalorder %s180, %s181
    %p193 = scmp.eq.s32.totalorder %s24, 1
    %p194 = por %p192, %p193
    %p196 = scmp.ne.s32.totalorder %s181, %s195
    %p197 = scmp.eq.s32.totalorder %s24, 0
    %p198 = por %p196, %p197
    %s200 = sadd.s32 %s199, 1
    %p203 = scmp.eq.s32.totalorder %s18, 1
    %p204 = scmp.ne.s32.totalorder %s199, %s201
    %p205 = scmp.eq.s32.totalorder %s18, 0
    %p206 = por %p204, %p205
    %p207 = scmp.ne.s32.totalorder %s199, %s201
    %p208 = scmp.eq.s32.totalorder %s23, 1
    %p209 = por %p207, %p208
    %p210 = scmp.ne.s32.totalorder %s201, %s202
    %p211 = scmp.eq.s32.totalorder %s23, 0
    %p212 = por %p210, %p211
    %p213 = scmp.ne.s32.totalorder %s201, %s202
    %p214 = scmp.eq.s32.totalorder %s24, 1
    %p215 = por %p213, %p214
    %p217 = scmp.ne.s32.totalorder %s202, %s216
    %p218 = scmp.eq.s32.totalorder %s24, 0
    %p219 = por %p217, %p218
    %s221 = sadd.s32 %s220, 1
    %p224 = scmp.eq.s32.totalorder %s18, 1
    %p225 = scmp.ne.s32.totalorder %s220, %s222
    %p226 = scmp.eq.s32.totalorder %s18, 0
    %p227 = por %p225, %p226
    %p228 = scmp.ne.s32.totalorder %s220, %s222
    %p229 = scmp.eq.s32.totalorder %s23, 1
    %p230 = por %p228, %p229
    %p231 = scmp.ne.s32.totalorder %s222, %s223
    %p232 = scmp.eq.s32.totalorder %s23, 0
    %p233 = por %p231, %p232
    %p234 = scmp.ne.s32.totalorder %s222, %s223
    %p235 = scmp.eq.s32.totalorder %s24, 1
    %p236 = por %p234, %p235
    %p238 = scmp.ne.s32.totalorder %s223, %s237
    %p239 = scmp.eq.s32.totalorder %s24, 0
    %p240 = por %p238, %p239
    %s242 = sadd.s32 %s241, 1
    %p245 = scmp.eq.s32.totalorder %s18, 1
    %p246 = scmp.ne.s32.totalorder %s241, %s243
    %p247 = scmp.eq.s32.totalorder %s18, 0
    %p248 = por %p246, %p247
    %p249 = scmp.ne.s32.totalorder %s241, %s243
    %p250 = scmp.eq.s32.totalorder %s23, 1
    %p251 = por %p249, %p250
    %p252 = scmp.ne.s32.totalorder %s243, %s244
    %p253 = scmp.eq.s32.totalorder %s23, 0
    %p254 = por %p252, %p253
    %p255 = scmp.ne.s32.totalorder %s243, %s244
    %p256 = scmp.eq.s32.totalorder %s24, 1
    %p257 = por %p255, %p256
    %p259 = scmp.ne.s32.totalorder %s244, %s258
    %p260 = scmp.eq.s32.totalorder %s24, 0
    %p261 = por %p259, %p260
    %s263 = sadd.s32 %s262, 1
    %p266 = scmp.eq.s32.totalorder %s18, 1
    %p267 = scmp.ne.s32.totalorder %s262, %s264
    %p268 = scmp.eq.s32.totalorder %s18, 0
    %p269 = por %p267, %p268
    %p270 = scmp.ne.s32.totalorder %s262, %s264
    %p271 = scmp.eq.s32.totalorder %s23, 1
    %p272 = por %p270, %p271
    %p273 = scmp.ne.s32.totalorder %s264, %s265
    %p274 = scmp.eq.s32.totalorder %s23, 0
    %p275 = por %p273, %p274
    %p276 = scmp.ne.s32.totalorder %s264, %s265
    %p277 = scmp.eq.s32.totalorder %s24, 1
    %p278 = por %p276, %p277
    %p280 = scmp.ne.s32.totalorder %s265, %s279
    %p281 = scmp.eq.s32.totalorder %s24, 0
    %p282 = por %p280, %p281
    %s283 = ssub.s32 %s18, %s25
    %p284 = scmp.eq.s32.totalorder %s283, 0
    %s286 = sadd.s32 %s285, 1
    %s287 = scalar_select %p284, %s285, %s286
    %p290 = pneg %p284
    %p291 = scmp.eq.s32.totalorder %s18, 1
    %p292 = por %p290, %p291
    %p293 = scmp.ne.s32.totalorder %s285, %s288
    %p294 = scmp.eq.s32.totalorder %s18, 0
    %p295 = por %p293, %p294
    %p296 = scmp.ne.s32.totalorder %s285, %s288
    %p297 = scmp.eq.s32.totalorder %s23, 1
    %p298 = por %p296, %p297
    %p299 = scmp.ne.s32.totalorder %s288, %s289
    %p300 = scmp.eq.s32.totalorder %s23, 0
    %p301 = por %p299, %p300
    %p302 = scmp.ne.s32.totalorder %s288, %s289
    %p303 = scmp.eq.s32.totalorder %s24, 1
    %p304 = por %p302, %p303
    %p306 = scmp.ne.s32.totalorder %s289, %s305
    %p307 = scmp.eq.s32.totalorder %s24, 0
    %p308 = por %p306, %p307
    %p309 = scmp.le.s32.totalorder 1, %s18
    %p310 = scmp.lt.s32.totalorder %s18, 3
    %p311 = pnand %p309, %p310
    %p312 = pneg %p311
    // Predicated region
    $region9: #{noise_encoder_block.1} parent=5 // pred_check
      _
    $region10: #{noise_encoder_block.1} parent=5 // pred_check_branch
      %314 = sbr.rel (%p311) target = $region12
    $region11: #{noise_encoder_block.1} parent=5 // pred_region
      %s315 = ssub.s32 %s18, 1
      // Predicated region
      $region13: #{noise_encoder_block.1} parent=11 // pred_check
        %p316 = pneg %p65
      $region14: #{noise_encoder_block.1} parent=11 // pred_check_branch
        %318 = sbr.rel (%p316) target = $region16
      $region15: #{noise_encoder_block.1} parent=11 // pred_region
        _
      $region16: #{noise_encoder_block.1} parent=11 // pred_fallthru
        _
      // Predicated region
      $region17: #{noise_encoder_block.1} parent=11 // pred_check
        %p319 = pneg %p86
      $region18: #{noise_encoder_block.1} parent=11 // pred_check_branch
        %321 = sbr.rel (%p319) target = $region20
      $region19: #{noise_encoder_block.1} parent=11 // pred_region
        _
      $region20: #{noise_encoder_block.1} parent=11 // pred_fallthru
        _
      // Predicated region
      $region21: #{noise_encoder_block.1} parent=11 // pred_check
        %p322 = pneg %p107
      $region22: #{noise_encoder_block.1} parent=11 // pred_check_branch
        %324 = sbr.rel (%p322) target = $region24
      $region23: #{noise_encoder_block.1} parent=11 // pred_region
        _
      $region24: #{noise_encoder_block.1} parent=11 // pred_fallthru
        _
      // Predicated region
      $region25: #{noise_encoder_block.1} parent=11 // pred_check
        %p325 = pneg %p128
      $region26: #{noise_encoder_block.1} parent=11 // pred_check_branch
        %327 = sbr.rel (%p325) target = $region28
      $region27: #{noise_encoder_block.1} parent=11 // pred_region
        _
      $region28: #{noise_encoder_block.1} parent=11 // pred_fallthru
        _
      // Predicated region
      $region29: #{noise_encoder_block.1} parent=11 // pred_check
        %p328 = pneg %p149
      $region30: #{noise_encoder_block.1} parent=11 // pred_check_branch
        %330 = sbr.rel (%p328) target = $region32
      $region31: #{noise_encoder_block.1} parent=11 // pred_region
        _
      $region32: #{noise_encoder_block.1} parent=11 // pred_fallthru
        _
      // Predicated region
      $region33: #{noise_encoder_block.1} parent=11 // pred_check
        %p331 = pneg %p170
      $region34: #{noise_encoder_block.1} parent=11 // pred_check_branch
        %333 = sbr.rel (%p331) target = $region36
      $region35: #{noise_encoder_block.1} parent=11 // pred_region
        _
      $region36: #{noise_encoder_block.1} parent=11 // pred_fallthru
        _
      // Predicated region
      $region37: #{noise_encoder_block.1} parent=11 // pred_check
        %p334 = pneg %p191
      $region38: #{noise_encoder_block.1} parent=11 // pred_check_branch
        %336 = sbr.rel (%p334) target = $region40
      $region39: #{noise_encoder_block.1} parent=11 // pred_region
        _
      $region40: #{noise_encoder_block.1} parent=11 // pred_fallthru
        _
      // Predicated region
      $region41: #{noise_encoder_block.1} parent=11 // pred_check
        %p337 = pneg %p212
      $region42: #{noise_encoder_block.1} parent=11 // pred_check_branch
        %339 = sbr.rel (%p337) target = $region44
      $region43: #{noise_encoder_block.1} parent=11 // pred_region
        _
      $region44: #{noise_encoder_block.1} parent=11 // pred_fallthru
        _
      // Predicated region
      $region45: #{noise_encoder_block.1} parent=11 // pred_check
        %p340 = pneg %p233
      $region46: #{noise_encoder_block.1} parent=11 // pred_check_branch
        %342 = sbr.rel (%p340) target = $region48
      $region47: #{noise_encoder_block.1} parent=11 // pred_region
        _
      $region48: #{noise_encoder_block.1} parent=11 // pred_fallthru
        _
      // Predicated region
      $region49: #{noise_encoder_block.1} parent=11 // pred_check
        %p343 = pneg %p254
      $region50: #{noise_encoder_block.1} parent=11 // pred_check_branch
        %345 = sbr.rel (%p343) target = $region52
      $region51: #{noise_encoder_block.1} parent=11 // pred_region
        _
      $region52: #{noise_encoder_block.1} parent=11 // pred_fallthru
        _
      // Predicated region
      $region53: #{noise_encoder_block.1} parent=11 // pred_check
        %p346 = pneg %p275
      $region54: #{noise_encoder_block.1} parent=11 // pred_check_branch
        %348 = sbr.rel (%p346) target = $region56
      $region55: #{noise_encoder_block.1} parent=11 // pred_region
        _
      $region56: #{noise_encoder_block.1} parent=11 // pred_fallthru
        _
    $region12: #{noise_encoder_block.1} parent=5 // pred_fallthru
      _
    %p349 = scmp.lt.s32.totalorder %s18, 2
    // Predicated region
    $region57: #{noise_encoder_block.1} parent=5 // pred_check
      %p350 = pneg %p349
    $region58: #{noise_encoder_block.1} parent=5 // pred_check_branch
      %352 = sbr.rel (%p350) target = $region60
    $region59: #{noise_encoder_block.1} parent=5 // pred_region
      // Predicated region
      $region61: #{noise_encoder_block.1} parent=59 // pred_check
        %p353 = pneg %p38
      $region62: #{noise_encoder_block.1} parent=59 // pred_check_branch
        %355 = sbr.rel (%p353) target = $region64
      $region63: #{noise_encoder_block.1} parent=59 // pred_region
        %p356 = scmp.lt.s32.totalorder %s18, 1
        %s357 = scalar_select %p356, %s18, 1
        %s358 = smul.addr %s357, 2
        %s359 = smul.addr %s358, 4
        %s360 = scalar_lea.vmem %s0, %s359
      $region64: #{noise_encoder_block.1} parent=59 // pred_fallthru
        _
    $region60: #{noise_encoder_block.1} parent=5 // pred_fallthru
      _
    %p361 = scmp.le.s32.totalorder 1, %s18
    %p362 = scmp.lt.s32.totalorder %s18, 3
    %p363 = pnand %p361, %p362
    %p364 = pneg %p363
    // Predicated region
    $region65: #{noise_encoder_block.1} parent=5 // pred_check
      _
    $region66: #{noise_encoder_block.1} parent=5 // pred_check_branch
      %366 = sbr.rel (%p363) target = $region68
    $region67: #{noise_encoder_block.1} parent=5 // pred_region
      %s367 = ssub.s32 %s18, 1
      %p368 = scmp.lt.s32.totalorder %s23, 1
      %s369 = scalar_select %p368, %s23, 1
      %s370 = smul.addr %s369, 2
      %s371 = smul.addr %s370, 4
      %s372 = scalar_lea.vmem %s0, %s371
      %p373 = pneg %p44
      %p374 = pneg %p41
      %p375 = pneg %p65
      %p376 = pneg %p62
      %p377 = pneg %p86
      %p378 = pneg %p83
      %p379 = pneg %p107
      %p380 = pneg %p104
      %p381 = pneg %p128
      %p382 = pneg %p125
      %p383 = pneg %p149
      %p384 = pneg %p146
      %p385 = pneg %p170
      %p386 = pneg %p167
      %p387 = pneg %p191
      %p388 = pneg %p188
      %p389 = pneg %p212
      %p390 = pneg %p209
      %p391 = pneg %p233
      %p392 = pneg %p230
      %p393 = pneg %p254
      %p394 = pneg %p251
      %p395 = pneg %p275
      %p396 = pneg %p272
      %p397 = pneg %p301
      %p398 = pneg %p298
      %p399 = scmp.lt.s32.totalorder %s23, 1
      %s400 = scalar_select %p399, %s23, 1
      %s401 = smul.addr %s400, 2
      %s402 = smul.addr %s401, 4
      %s403 = scalar_lea.vmem %s12, %s402
      %p404 = scmp.lt.s32.totalorder %s23, 1
      %s405 = scalar_select %p404, %s23, 1
      %s406 = smul.addr %s405, 2
      %s407 = smul.addr %s406, 4
      %s408 = scalar_lea.vmem %s0, %s407
      %p409 = scmp.lt.s32.totalorder %s23, 1
      %s410 = scalar_select %p409, %s23, 1
      %s411 = smul.addr %s410, 2
      %s412 = smul.addr %s411, 4
      %s413 = scalar_lea.vmem %s12, %s412
      %v414 = vld [vmem:[%s1] sm:$0xff]
      %v415 = vld [vmem:[%s1 + $0x8] sm:$0xff]
      %v416 = vld [vmem:[%s1 + $0x10] sm:$0x1]
      %v417 = vld [vmem:[%s1 + $0x18] sm:$0x1]
      %v418 = vld [vmem:[%s3] sm:$0xff]
      %v419 = vld [vmem:[%s7] sm:$0xff]
      %v420 = vld [vmem:[%s11] sm:$0xf]
      %v421 = vld [vmem:[%s4] sm:$0xff]
      %v422 = vld [vmem:[%s4 + $0x8] sm:$0xff]
      %v423 = vld [vmem:[%s5] sm:$0xff]
      %v424 = vld [vmem:[%s5 + $0x8] sm:$0xff]
      %v425 = vld [vmem:[%s8] sm:$0xff]
      %v426 = vld [vmem:[%s8 + $0x8] sm:$0xff]
      %v427 = vld [vmem:[%s9] sm:$0xff]
      %v428 = vld [vmem:[%s9 + $0x8] sm:$0xff]
      %v429 = vld [vmem:[%s10] sm:$0xf]
      %v430 = vld [vmem:[%s408] sm:$0xff]
      %v432 = vcombine.high %v430, %v430
      %434 = vrot.lane.b32.xlu0 %v430, 17
      %v435 = vpop.permute.xlu0 %434
      %436 = vrot.lane.b32.xlu0 %v432, 17
      %v437 = vpop.permute.xlu0 %436
      %v438 = vlaneseq
      %v439 = vand.u32 %v438, 127
      %vm440 = vcmp.lt.s32.totalorder %v439, 17
      %v441 = vsel %vm440, %v435, %v437
      %v442 = vsel %vm440, %v437, %v435
      %v443 = vlaneseq
      %v444 = vshrl.u32 %v443, 7
      %v445 = vsub.s32 0, %v444
      %v446 = vrot.slane %v414, %v445
      %v447 = vlaneseq
      %v448 = vshrl.u32 %v447, 7
      %v449 = vsub.s32 0, %v448
      %v450 = vrot.slane %v415, %v449
      %v451 = vmul.f32 %v442, %v446
      %v452 = vmul.f32 %v441, %v450
      %v453 = vld [vmem:[%s2] sm:$0xff]
      %454 = vrot.lane.b32.xlu0 %v430, 16
      %v455 = vpop.permute.xlu0 %454
      %456 = vrot.lane.b32.xlu0 %v432, 16
      %v457 = vpop.permute.xlu0 %456
      %vm458 = vcmp.lt.s32.totalorder %v439, 16
      %v459 = vsel %vm458, %v455, %v457
      %v460 = vsel %vm458, %v457, %v455
      %v461 = vlaneseq
      %v462 = vshrl.u32 %v461, 7
      %v463 = vsub.s32 1, %v462
      %v464 = vrot.slane %v414, %v463
      %v465 = vlaneseq
      %v466 = vshrl.u32 %v465, 7
      %v467 = vsub.s32 1, %v466
      %v468 = vrot.slane %v415, %v467
      %v469 = vmul.f32 %v460, %v464
      %v470 = vmul.f32 %v459, %v468
      %v471 = vld [vmem:[%s2 + $0x8] sm:$0xff]
      %vm472 = vcmask 31744
      %v474 = vsel %vm472, %v471, 0
      %vm476 = vcmask 1043456
      %v478 = vsel %vm476, %v469, 0
      %v481 = vsel %vm476, %v470, 0
      %483 = vmatprep.subr.mxu0 %v481
      %484 = vmatpush1.msra.mxu0 %v478
      %485 = vmatprep.subr.mxu0 0.0
      %486 = vmatpush1.msra.mxu0 0.0
      %487 = vmatprep.subr.mxu0 0.0
      %488 = vmatpush1.msra.mxu0 0.0
      %489 = vmatprep.subr.mxu0 0.0
      %490 = vmatpush1.msra.mxu0 0.0
      %491 = vmatprep.subr.mxu0 0.0
      %492 = vmatpush1.msra.mxu0 0.0
      %493 = vmatprep.subr.mxu0 0.0
      %494 = vmatpush1.msra.mxu0 0.0
      %495 = vmatprep.subr.mxu0 0.0
      %496 = vmatpush1.msra.mxu0 0.0
      %497 = vmatprep.subr.mxu0 0.0
      %498 = vmatpush1.msra.mxu0 0.0
      %499 = vmatprep.subr.mxu0 0.0
      %500 = vmatpush1.msra.mxu0 0.0
      %501 = vmatprep.subr.mxu0 0.0
      %502 = vmatpush1.msra.mxu0 0.0
      %503 = vmatprep.subr.mxu0 0.0
      %504 = vmatpush1.msra.mxu0 0.0
      %505 = vmatprep.subr.mxu0 0.0
      %506 = vmatpush1.msra.mxu0 0.0
      %507 = vmatprep.subr.mxu0 0.0
      %508 = vmatpush1.msra.mxu0 0.0
      %509 = vmatprep.subr.mxu0 0.0
      %510 = vmatpush1.msra.mxu0 0.0
      %511 = vmatprep.subr.mxu0 0.0
      %512 = vmatpush1.msra.mxu0 0.0
      %513 = vmatprep.subr.mxu0 0.0
      %514 = vmatpush1.msra.mxu0 0.0
      %515 = vmatprep.subr.mxu0 0.0
      %516 = vmatpush1.msra.mxu0 0.0
      %517 = vmatprep.subr.mxu0 0.0
      %518 = vmatpush1.msra.mxu0 0.0
      %519 = vmatprep.subr.mxu0 0.0
      %520 = vmatpush1.msra.mxu0 0.0
      %521 = vmatprep.subr.mxu0 0.0
      %522 = vmatpush1.msra.mxu0 0.0
      %523 = vmatprep.subr.mxu0 0.0
      %524 = vmatpush1.msra.mxu0 0.0
      %525 = vmatprep.subr.mxu0 0.0
      %526 = vmatpush1.msra.mxu0 0.0
      %527 = vmatprep.subr.mxu0 0.0
      %528 = vmatpush1.msra.mxu0 0.0
      %529 = vmatprep.subr.mxu0 0.0
      %530 = vmatpush1.msra.mxu0 0.0
      %531 = vmatprep.subr.mxu0 0.0
      %532 = vmatpush1.msra.mxu0 0.0
      %533 = vmatprep.subr.mxu0 0.0
      %534 = vmatpush1.msra.mxu0 0.0
      %535 = vmatprep.subr.mxu0 0.0
      %536 = vmatpush1.msra.mxu0 0.0
      %537 = vmatprep.subr.mxu0 0.0
      %538 = vmatpush1.msra.mxu0 0.0
      %539 = vmatprep.subr.mxu0 0.0
      %540 = vmatpush1.msra.mxu0 0.0
      %541 = vmatprep.subr.mxu0 0.0
      %542 = vmatpush1.msra.mxu0 0.0
      %543 = vmatprep.subr.mxu0 0.0
      %544 = vmatpush1.msra.mxu0 0.0
      %545 = vmatprep.subr.mxu0 0.0
      %546 = vmatpush1.msra.mxu0 0.0
      %547 = vmatprep.mubr.f32.mxu0 0.0
      %548 = vmatmul.mubr.f32.gmra.mrb[0].mxu0 %v474
      %v549 = vpop.f32.mrb[0].mxu0
      %v550 = vadd.f32 0.0, %v549
      %v551 = vpop.f32.mrb[0].mxu0
      %v552 = vadd.f32 0.0, %v551
      %553 = vdwg.mxu0
      %v555 = vsel %vm472, %v453, 0
      %v558 = vsel %vm476, %v451, 0
      %v561 = vsel %vm476, %v452, 0
      %563 = vmatprep.subr.mxu0 %v561
      %564 = vmatpush1.msra.mxu0 %v558
      %565 = vmatprep.subr.mxu0 0.0
      %566 = vmatpush1.msra.mxu0 0.0
      %567 = vmatprep.subr.mxu0 0.0
      %568 = vmatpush1.msra.mxu0 0.0
      %569 = vmatprep.subr.mxu0 0.0
      %570 = vmatpush1.msra.mxu0 0.0
      %571 = vmatprep.subr.mxu0 0.0
      %572 = vmatpush1.msra.mxu0 0.0
      %573 = vmatprep.subr.mxu0 0.0
      %574 = vmatpush1.msra.mxu0 0.0
      %575 = vmatprep.subr.mxu0 0.0
      %576 = vmatpush1.msra.mxu0 0.0
      %577 = vmatprep.subr.mxu0 0.0
      %578 = vmatpush1.msra.mxu0 0.0
      %579 = vmatprep.subr.mxu0 0.0
      %580 = vmatpush1.msra.mxu0 0.0
      %581 = vmatprep.subr.mxu0 0.0
      %582 = vmatpush1.msra.mxu0 0.0
      %583 = vmatprep.subr.mxu0 0.0
      %584 = vmatpush1.msra.mxu0 0.0
      %585 = vmatprep.subr.mxu0 0.0
      %586 = vmatpush1.msra.mxu0 0.0
      %587 = vmatprep.subr.mxu0 0.0
      %588 = vmatpush1.msra.mxu0 0.0
      %589 = vmatprep.subr.mxu0 0.0
      %590 = vmatpush1.msra.mxu0 0.0
      %591 = vmatprep.subr.mxu0 0.0
      %592 = vmatpush1.msra.mxu0 0.0
      %593 = vmatprep.subr.mxu0 0.0
      %594 = vmatpush1.msra.mxu0 0.0
      %595 = vmatprep.subr.mxu0 0.0
      %596 = vmatpush1.msra.mxu0 0.0
      %597 = vmatprep.subr.mxu0 0.0
      %598 = vmatpush1.msra.mxu0 0.0
      %599 = vmatprep.subr.mxu0 0.0
      %600 = vmatpush1.msra.mxu0 0.0
      %601 = vmatprep.subr.mxu0 0.0
      %602 = vmatpush1.msra.mxu0 0.0
      %603 = vmatprep.subr.mxu0 0.0
      %604 = vmatpush1.msra.mxu0 0.0
      %605 = vmatprep.subr.mxu0 0.0
      %606 = vmatpush1.msra.mxu0 0.0
      %607 = vmatprep.subr.mxu0 0.0
      %608 = vmatpush1.msra.mxu0 0.0
      %609 = vmatprep.subr.mxu0 0.0
      %610 = vmatpush1.msra.mxu0 0.0
      %611 = vmatprep.subr.mxu0 0.0
      %612 = vmatpush1.msra.mxu0 0.0
      %613 = vmatprep.subr.mxu0 0.0
      %614 = vmatpush1.msra.mxu0 0.0
      %615 = vmatprep.subr.mxu0 0.0
      %616 = vmatpush1.msra.mxu0 0.0
      %617 = vmatprep.subr.mxu0 0.0
      %618 = vmatpush1.msra.mxu0 0.0
      %619 = vmatprep.subr.mxu0 0.0
      %620 = vmatpush1.msra.mxu0 0.0
      %621 = vmatprep.subr.mxu0 0.0
      %622 = vmatpush1.msra.mxu0 0.0
      %623 = vmatprep.subr.mxu0 0.0
      %624 = vmatpush1.msra.mxu0 0.0
      %625 = vmatprep.subr.mxu0 0.0
      %626 = vmatpush1.msra.mxu0 0.0
      %627 = vmatprep.mubr.f32.mxu0 0.0
      %628 = vmatmul.mubr.f32.gmra.mrb[0].mxu0 %v555
      %v629 = vpop.f32.mrb[0].mxu0
      %v630 = vadd.f32 %v550, %v629
      %v631 = vpop.f32.mrb[0].mxu0
      %v632 = vadd.f32 %v552, %v631
      %633 = vdwg.mxu0
      %634 = vrot.lane.b32.xlu0 %v430, 15
      %v635 = vpop.permute.xlu0 %634
      %636 = vrot.lane.b32.xlu0 %v432, 15
      %v637 = vpop.permute.xlu0 %636
      %vm638 = vcmp.lt.s32.totalorder %v439, 15
      %v639 = vsel %vm638, %v635, %v637
      %v640 = vsel %vm638, %v637, %v635
      %v641 = vlaneseq
      %v642 = vshrl.u32 %v641, 7
      %v643 = vsub.s32 2, %v642
      %v644 = vrot.slane %v414, %v643
      %v645 = vlaneseq
      %v646 = vshrl.u32 %v645, 7
      %v647 = vsub.s32 2, %v646
      %v648 = vrot.slane %v415, %v647
      %v649 = vmul.f32 %v640, %v644
      %v650 = vmul.f32 %v639, %v648
      %v651 = vld [vmem:[%s2 + $0x10] sm:$0xff]
      %v653 = vsel %vm472, %v651, 0
      %v656 = vsel %vm476, %v649, 0
      %v659 = vsel %vm476, %v650, 0
      %661 = vmatprep.subr.mxu0 %v659
      %662 = vmatpush1.msra.mxu0 %v656
      %663 = vmatprep.subr.mxu0 0.0
      %664 = vmatpush1.msra.mxu0 0.0
      %665 = vmatprep.subr.mxu0 0.0
      %666 = vmatpush1.msra.mxu0 0.0
      %667 = vmatprep.subr.mxu0 0.0
      %668 = vmatpush1.msra.mxu0 0.0
      %669 = vmatprep.subr.mxu0 0.0
      %670 = vmatpush1.msra.mxu0 0.0
      %671 = vmatprep.subr.mxu0 0.0
      %672 = vmatpush1.msra.mxu0 0.0
      %673 = vmatprep.subr.mxu0 0.0
      %674 = vmatpush1.msra.mxu0 0.0
      %675 = vmatprep.subr.mxu0 0.0
      %676 = vmatpush1.msra.mxu0 0.0
      %677 = vmatprep.subr.mxu0 0.0
      %678 = vmatpush1.msra.mxu0 0.0
      %679 = vmatprep.subr.mxu0 0.0
      %680 = vmatpush1.msra.mxu0 0.0
      %681 = vmatprep.subr.mxu0 0.0
      %682 = vmatpush1.msra.mxu0 0.0
      %683 = vmatprep.subr.mxu0 0.0
      %684 = vmatpush1.msra.mxu0 0.0
      %685 = vmatprep.subr.mxu0 0.0
      %686 = vmatpush1.msra.mxu0 0.0
      %687 = vmatprep.subr.mxu0 0.0
      %688 = vmatpush1.msra.mxu0 0.0
      %689 = vmatprep.subr.mxu0 0.0
      %690 = vmatpush1.msra.mxu0 0.0
      %691 = vmatprep.subr.mxu0 0.0
      %692 = vmatpush1.msra.mxu0 0.0
      %693 = vmatprep.subr.mxu0 0.0
      %694 = vmatpush1.msra.mxu0 0.0
      %695 = vmatprep.subr.mxu0 0.0
      %696 = vmatpush1.msra.mxu0 0.0
      %697 = vmatprep.subr.mxu0 0.0
      %698 = vmatpush1.msra.mxu0 0.0
      %699 = vmatprep.subr.mxu0 0.0
      %700 = vmatpush1.msra.mxu0 0.0
      %701 = vmatprep.subr.mxu0 0.0
      %702 = vmatpush1.msra.mxu0 0.0
      %703 = vmatprep.subr.mxu0 0.0
      %704 = vmatpush1.msra.mxu0 0.0
      %705 = vmatprep.subr.mxu0 0.0
      %706 = vmatpush1.msra.mxu0 0.0
      %707 = vmatprep.subr.mxu0 0.0
      %708 = vmatpush1.msra.mxu0 0.0
      %709 = vmatprep.subr.mxu0 0.0
      %710 = vmatpush1.msra.mxu0 0.0
      %711 = vmatprep.subr.mxu0 0.0
      %712 = vmatpush1.msra.mxu0 0.0
      %713 = vmatprep.subr.mxu0 0.0
      %714 = vmatpush1.msra.mxu0 0.0
      %715 = vmatprep.subr.mxu0 0.0
      %716 = vmatpush1.msra.mxu0 0.0
      %717 = vmatprep.subr.mxu0 0.0
      %718 = vmatpush1.msra.mxu0 0.0
      %719 = vmatprep.subr.mxu0 0.0
      %720 = vmatpush1.msra.mxu0 0.0
      %721 = vmatprep.subr.mxu0 0.0
      %722 = vmatpush1.msra.mxu0 0.0
      %723 = vmatprep.subr.mxu0 0.0
      %724 = vmatpush1.msra.mxu0 0.0
      %725 = vmatprep.mubr.f32.mxu0 0.0
      %726 = vmatmul.mubr.f32.gmra.mrb[0].mxu0 %v653
      %v727 = vpop.f32.mrb[0].mxu0
      %v728 = vadd.f32 0.0, %v727
      %v729 = vpop.f32.mrb[0].mxu0
      %v730 = vadd.f32 0.0, %v729
      %731 = vdwg.mxu0
      %v732 = vadd.f32 %v630, %v728
      %v733 = vadd.f32 %v632, %v730
      %734 = vrot.lane.b32.xlu0 %v430, 1
      %v735 = vpop.permute.xlu0 %734
      %736 = vrot.lane.b32.xlu0 %v432, 1
      %v737 = vpop.permute.xlu0 %736
      %vm738 = vcmp.lt.s32.totalorder %v439, 1
      %v739 = vsel %vm738, %v735, %v737
      %v740 = vsel %vm738, %v737, %v735
      %v741 = vlaneseq
      %v742 = vshrl.u32 %v741, 7
      %v743 = vsub.s32 3, %v742
      %v744 = vrot.slane %v414, %v743
      %v745 = vlaneseq
      %v746 = vshrl.u32 %v745, 7
      %v747 = vsub.s32 3, %v746
      %v748 = vrot.slane %v415, %v747
      %v749 = vmul.f32 %v740, %v744
      %v750 = vmul.f32 %v739, %v748
      %v751 = vld [vmem:[%s2 + $0x18] sm:$0xff]
      %v753 = vsel %vm472, %v751, 0
      %v756 = vsel %vm476, %v749, 0
      %v759 = vsel %vm476, %v750, 0
      %761 = vmatprep.subr.mxu0 %v759
      %762 = vmatpush1.msra.mxu0 %v756
      %763 = vmatprep.subr.mxu0 0.0
      %764 = vmatpush1.msra.mxu0 0.0
      %765 = vmatprep.subr.mxu0 0.0
      %766 = vmatpush1.msra.mxu0 0.0
      %767 = vmatprep.subr.mxu0 0.0
      %768 = vmatpush1.msra.mxu0 0.0
      %769 = vmatprep.subr.mxu0 0.0
      %770 = vmatpush1.msra.mxu0 0.0
      %771 = vmatprep.subr.mxu0 0.0
      %772 = vmatpush1.msra.mxu0 0.0
      %773 = vmatprep.subr.mxu0 0.0
      %774 = vmatpush1.msra.mxu0 0.0
      %775 = vmatprep.subr.mxu0 0.0
      %776 = vmatpush1.msra.mxu0 0.0
      %777 = vmatprep.subr.mxu0 0.0
      %778 = vmatpush1.msra.mxu0 0.0
      %779 = vmatprep.subr.mxu0 0.0
      %780 = vmatpush1.msra.mxu0 0.0
      %781 = vmatprep.subr.mxu0 0.0
      %782 = vmatpush1.msra.mxu0 0.0
      %783 = vmatprep.subr.mxu0 0.0
      %784 = vmatpush1.msra.mxu0 0.0
      %785 = vmatprep.subr.mxu0 0.0
      %786 = vmatpush1.msra.mxu0 0.0
      %787 = vmatprep.subr.mxu0 0.0
      %788 = vmatpush1.msra.mxu0 0.0
      %789 = vmatprep.subr.mxu0 0.0
      %790 = vmatpush1.msra.mxu0 0.0
      %791 = vmatprep.subr.mxu0 0.0
      %792 = vmatpush1.msra.mxu0 0.0
      %793 = vmatprep.subr.mxu0 0.0
      %794 = vmatpush1.msra.mxu0 0.0
      %795 = vmatprep.subr.mxu0 0.0
      %796 = vmatpush1.msra.mxu0 0.0
      %797 = vmatprep.subr.mxu0 0.0
      %798 = vmatpush1.msra.mxu0 0.0
      %799 = vmatprep.subr.mxu0 0.0
      %800 = vmatpush1.msra.mxu0 0.0
      %801 = vmatprep.subr.mxu0 0.0
      %802 = vmatpush1.msra.mxu0 0.0
      %803 = vmatprep.subr.mxu0 0.0
      %804 = vmatpush1.msra.mxu0 0.0
      %805 = vmatprep.subr.mxu0 0.0
      %806 = vmatpush1.msra.mxu0 0.0
      %807 = vmatprep.subr.mxu0 0.0
      %808 = vmatpush1.msra.mxu0 0.0
      %809 = vmatprep.subr.mxu0 0.0
      %810 = vmatpush1.msra.mxu0 0.0
      %811 = vmatprep.subr.mxu0 0.0
      %812 = vmatpush1.msra.mxu0 0.0
      %813 = vmatprep.subr.mxu0 0.0
      %814 = vmatpush1.msra.mxu0 0.0
      %815 = vmatprep.subr.mxu0 0.0
      %816 = vmatpush1.msra.mxu0 0.0
      %817 = vmatprep.subr.mxu0 0.0
      %818 = vmatpush1.msra.mxu0 0.0
      %819 = vmatprep.subr.mxu0 0.0
      %820 = vmatpush1.msra.mxu0 0.0
      %821 = vmatprep.subr.mxu0 0.0
      %822 = vmatpush1.msra.mxu0 0.0
      %823 = vmatprep.subr.mxu0 0.0
      %824 = vmatpush1.msra.mxu0 0.0
      %825 = vmatprep.mubr.f32.mxu0 0.0
      %826 = vmatmul.mubr.f32.gmra.mrb[0].mxu0 %v753
      %v827 = vpop.f32.mrb[0].mxu0
      %v828 = vadd.f32 0.0, %v827
      %v829 = vpop.f32.mrb[0].mxu0
      %v830 = vadd.f32 0.0, %v829
      %831 = vdwg.mxu0
      %v832 = vadd.f32 %v732, %v828
      %v833 = vadd.f32 %v733, %v830
      %v834 = vld [vmem:[%s2 + $0x20] sm:$0xff]
      %v836 = vsel %vm472, %v834, 0
      %v838 = vsel %vm476, %v430, 0
      %v840 = vsel %vm476, %v432, 0
      %842 = vmatprep.subr.mxu0 %v840
      %843 = vmatpush1.msra.mxu0 %v838
      %844 = vmatprep.subr.mxu0 0.0
      %845 = vmatpush1.msra.mxu0 0.0
      %846 = vmatprep.subr.mxu0 0.0
      %847 = vmatpush1.msra.mxu0 0.0
      %848 = vmatprep.subr.mxu0 0.0
      %849 = vmatpush1.msra.mxu0 0.0
      %850 = vmatprep.subr.mxu0 0.0
      %851 = vmatpush1.msra.mxu0 0.0
      %852 = vmatprep.subr.mxu0 0.0
      %853 = vmatpush1.msra.mxu0 0.0
      %854 = vmatprep.subr.mxu0 0.0
      %855 = vmatpush1.msra.mxu0 0.0
      %856 = vmatprep.subr.mxu0 0.0
      %857 = vmatpush1.msra.mxu0 0.0
      %858 = vmatprep.subr.mxu0 0.0
      %859 = vmatpush1.msra.mxu0 0.0
      %860 = vmatprep.subr.mxu0 0.0
      %861 = vmatpush1.msra.mxu0 0.0
      %862 = vmatprep.subr.mxu0 0.0
      %863 = vmatpush1.msra.mxu0 0.0
      %864 = vmatprep.subr.mxu0 0.0
      %865 = vmatpush1.msra.mxu0 0.0
      %866 = vmatprep.subr.mxu0 0.0
      %867 = vmatpush1.msra.mxu0 0.0
      %868 = vmatprep.subr.mxu0 0.0
      %869 = vmatpush1.msra.mxu0 0.0
      %870 = vmatprep.subr.mxu0 0.0
      %871 = vmatpush1.msra.mxu0 0.0
      %872 = vmatprep.subr.mxu0 0.0
      %873 = vmatpush1.msra.mxu0 0.0
      %874 = vmatprep.subr.mxu0 0.0
      %875 = vmatpush1.msra.mxu0 0.0
      %876 = vmatprep.subr.mxu0 0.0
      %877 = vmatpush1.msra.mxu0 0.0
      %878 = vmatprep.subr.mxu0 0.0
      %879 = vmatpush1.msra.mxu0 0.0
      %880 = vmatprep.subr.mxu0 0.0
      %881 = vmatpush1.msra.mxu0 0.0
      %882 = vmatprep.subr.mxu0 0.0
      %883 = vmatpush1.msra.mxu0 0.0
      %884 = vmatprep.subr.mxu0 0.0
      %885 = vmatpush1.msra.mxu0 0.0
      %886 = vmatprep.subr.mxu0 0.0
      %887 = vmatpush1.msra.mxu0 0.0
      %888 = vmatprep.subr.mxu0 0.0
      %889 = vmatpush1.msra.mxu0 0.0
      %890 = vmatprep.subr.mxu0 0.0
      %891 = vmatpush1.msra.mxu0 0.0
      %892 = vmatprep.subr.mxu0 0.0
      %893 = vmatpush1.msra.mxu0 0.0
      %894 = vmatprep.subr.mxu0 0.0
      %895 = vmatpush1.msra.mxu0 0.0
      %896 = vmatprep.subr.mxu0 0.0
      %897 = vmatpush1.msra.mxu0 0.0
      %898 = vmatprep.subr.mxu0 0.0
      %899 = vmatpush1.msra.mxu0 0.0
      %900 = vmatprep.subr.mxu0 0.0
      %901 = vmatpush1.msra.mxu0 0.0
      %902 = vmatprep.subr.mxu0 0.0
      %903 = vmatpush1.msra.mxu0 0.0
      %904 = vmatprep.subr.mxu0 0.0
      %905 = vmatpush1.msra.mxu0 0.0
      %906 = vmatprep.mubr.f32.mxu0 0.0
      %907 = vmatmul.mubr.f32.gmra.mrb[0].mxu0 %v836
      %v908 = vpop.f32.mrb[0].mxu0
      %v909 = vadd.f32 0.0, %v908
      %v910 = vpop.f32.mrb[0].mxu0
      %v911 = vadd.f32 0.0, %v910
      %912 = vdwg.mxu0
      %v913 = vadd.f32 %v832, %v909
      %v914 = vadd.f32 %v833, %v911
      %915 = vrot.lane.b32.xlu0 %v430, 127
      %v916 = vpop.permute.xlu0 %915
      %917 = vrot.lane.b32.xlu0 %v432, 127
      %v918 = vpop.permute.xlu0 %917
      %vm919 = vcmp.lt.s32.totalorder %v439, 127
      %v920 = vsel %vm919, %v916, %v918
      %v921 = vsel %vm919, %v918, %v916
      %v922 = vlaneseq
      %v923 = vshrl.u32 %v922, 7
      %v924 = vsub.s32 5, %v923
      %v925 = vrot.slane %v414, %v924
      %v926 = vlaneseq
      %v927 = vshrl.u32 %v926, 7
      %v928 = vsub.s32 5, %v927
      %v929 = vrot.slane %v415, %v928
      %v930 = vmul.f32 %v920, %v925
      %v931 = vmul.f32 %v921, %v929
      %v932 = vld [vmem:[%s2 + $0x28] sm:$0xff]
      %v934 = vsel %vm472, %v932, 0
      %v937 = vsel %vm476, %v930, 0
      %v940 = vsel %vm476, %v931, 0
      %942 = vmatprep.subr.mxu0 %v940
      %943 = vmatpush1.msra.mxu0 %v937
      %944 = vmatprep.subr.mxu0 0.0
      %945 = vmatpush1.msra.mxu0 0.0
      %946 = vmatprep.subr.mxu0 0.0
      %947 = vmatpush1.msra.mxu0 0.0
      %948 = vmatprep.subr.mxu0 0.0
      %949 = vmatpush1.msra.mxu0 0.0
      %950 = vmatprep.subr.mxu0 0.0
      %951 = vmatpush1.msra.mxu0 0.0
      %952 = vmatprep.subr.mxu0 0.0
      %953 = vmatpush1.msra.mxu0 0.0
      %954 = vmatprep.subr.mxu0 0.0
      %955 = vmatpush1.msra.mxu0 0.0
      %956 = vmatprep.subr.mxu0 0.0
      %957 = vmatpush1.msra.mxu0 0.0
      %958 = vmatprep.subr.mxu0 0.0
      %959 = vmatpush1.msra.mxu0 0.0
      %960 = vmatprep.subr.mxu0 0.0
      %961 = vmatpush1.msra.mxu0 0.0
      %962 = vmatprep.subr.mxu0 0.0
      %963 = vmatpush1.msra.mxu0 0.0
      %964 = vmatprep.subr.mxu0 0.0
      %965 = vmatpush1.msra.mxu0 0.0
      %966 = vmatprep.subr.mxu0 0.0
      %967 = vmatpush1.msra.mxu0 0.0
      %968 = vmatprep.subr.mxu0 0.0
      %969 = vmatpush1.msra.mxu0 0.0
      %970 = vmatprep.subr.mxu0 0.0
      %971 = vmatpush1.msra.mxu0 0.0
      %972 = vmatprep.subr.mxu0 0.0
      %973 = vmatpush1.msra.mxu0 0.0
      %974 = vmatprep.subr.mxu0 0.0
      %975 = vmatpush1.msra.mxu0 0.0
      %976 = vmatprep.subr.mxu0 0.0
      %977 = vmatpush1.msra.mxu0 0.0
      %978 = vmatprep.subr.mxu0 0.0
      %979 = vmatpush1.msra.mxu0 0.0
      %980 = vmatprep.subr.mxu0 0.0
      %981 = vmatpush1.msra.mxu0 0.0
      %982 = vmatprep.subr.mxu0 0.0
      %983 = vmatpush1.msra.mxu0 0.0
      %984 = vmatprep.subr.mxu0 0.0
      %985 = vmatpush1.msra.mxu0 0.0
      %986 = vmatprep.subr.mxu0 0.0
      %987 = vmatpush1.msra.mxu0 0.0
      %988 = vmatprep.subr.mxu0 0.0
      %989 = vmatpush1.msra.mxu0 0.0
      %990 = vmatprep.subr.mxu0 0.0
      %991 = vmatpush1.msra.mxu0 0.0
      %992 = vmatprep.subr.mxu0 0.0
      %993 = vmatpush1.msra.mxu0 0.0
      %994 = vmatprep.subr.mxu0 0.0
      %995 = vmatpush1.msra.mxu0 0.0
      %996 = vmatprep.subr.mxu0 0.0
      %997 = vmatpush1.msra.mxu0 0.0
      %998 = vmatprep.subr.mxu0 0.0
      %999 = vmatpush1.msra.mxu0 0.0
      %1000 = vmatprep.subr.mxu0 0.0
      %1001 = vmatpush1.msra.mxu0 0.0
      %1002 = vmatprep.subr.mxu0 0.0
      %1003 = vmatpush1.msra.mxu0 0.0
      %1004 = vmatprep.subr.mxu0 0.0
      %1005 = vmatpush1.msra.mxu0 0.0
      %1006 = vmatprep.mubr.f32.mxu0 0.0
      %1007 = vmatmul.mubr.f32.gmra.mrb[0].mxu0 %v934
      %v1008 = vpop.f32.mrb[0].mxu0
      %v1009 = vadd.f32 0.0, %v1008
      %v1010 = vpop.f32.mrb[0].mxu0
      %v1011 = vadd.f32 0.0, %v1010
      %1012 = vdwg.mxu0
      %v1013 = vadd.f32 %v913, %v1009
      %v1014 = vadd.f32 %v914, %v1011
      %1015 = vrot.lane.b32.xlu0 %v430, 113
      %v1016 = vpop.permute.xlu0 %1015
      %1017 = vrot.lane.b32.xlu0 %v432, 113
      %v1018 = vpop.permute.xlu0 %1017
      %vm1019 = vcmp.lt.s32.totalorder %v439, 113
      %v1020 = vsel %vm1019, %v1016, %v1018
      %v1021 = vsel %vm1019, %v1018, %v1016
      %v1022 = vlaneseq
      %v1023 = vshrl.u32 %v1022, 7
      %v1024 = vsub.s32 6, %v1023
      %v1025 = vrot.slane %v414, %v1024
      %v1026 = vlaneseq
      %v1027 = vshrl.u32 %v1026, 7
      %v1028 = vsub.s32 6, %v1027
      %v1029 = vrot.slane %v415, %v1028
      %v1030 = vmul.f32 %v1020, %v1025
      %v1031 = vmul.f32 %v1021, %v1029
      %v1032 = vld [vmem:[%s2 + $0x30] sm:$0xff]
      %v1034 = vsel %vm472, %v1032, 0
      %v1037 = vsel %vm476, %v1030, 0
      %v1040 = vsel %vm476, %v1031, 0
      %1042 = vmatprep.subr.mxu0 %v1040
      %1043 = vmatpush1.msra.mxu0 %v1037
      %1044 = vmatprep.subr.mxu0 0.0
      %1045 = vmatpush1.msra.mxu0 0.0
      %1046 = vmatprep.subr.mxu0 0.0
      %1047 = vmatpush1.msra.mxu0 0.0
      %1048 = vmatprep.subr.mxu0 0.0
      %1049 = vmatpush1.msra.mxu0 0.0
      %1050 = vmatprep.subr.mxu0 0.0
      %1051 = vmatpush1.msra.mxu0 0.0
      %1052 = vmatprep.subr.mxu0 0.0
      %1053 = vmatpush1.msra.mxu0 0.0
      %1054 = vmatprep.subr.mxu0 0.0
      %1055 = vmatpush1.msra.mxu0 0.0
      %1056 = vmatprep.subr.mxu0 0.0
      %1057 = vmatpush1.msra.mxu0 0.0
      %1058 = vmatprep.subr.mxu0 0.0
      %1059 = vmatpush1.msra.mxu0 0.0
      %1060 = vmatprep.subr.mxu0 0.0
      %1061 = vmatpush1.msra.mxu0 0.0
      %1062 = vmatprep.subr.mxu0 0.0
      %1063 = vmatpush1.msra.mxu0 0.0
      %1064 = vmatprep.subr.mxu0 0.0
      %1065 = vmatpush1.msra.mxu0 0.0
      %1066 = vmatprep.subr.mxu0 0.0
      %1067 = vmatpush1.msra.mxu0 0.0
      %1068 = vmatprep.subr.mxu0 0.0
      %1069 = vmatpush1.msra.mxu0 0.0
      %1070 = vmatprep.subr.mxu0 0.0
      %1071 = vmatpush1.msra.mxu0 0.0
      %1072 = vmatprep.subr.mxu0 0.0
      %1073 = vmatpush1.msra.mxu0 0.0
      %1074 = vmatprep.subr.mxu0 0.0
      %1075 = vmatpush1.msra.mxu0 0.0
      %1076 = vmatprep.subr.mxu0 0.0
      %1077 = vmatpush1.msra.mxu0 0.0
      %1078 = vmatprep.subr.mxu0 0.0
      %1079 = vmatpush1.msra.mxu0 0.0
      %1080 = vmatprep.subr.mxu0 0.0
      %1081 = vmatpush1.msra.mxu0 0.0
      %1082 = vmatprep.subr.mxu0 0.0
      %1083 = vmatpush1.msra.mxu0 0.0
      %1084 = vmatprep.subr.mxu0 0.0
      %1085 = vmatpush1.msra.mxu0 0.0
      %1086 = vmatprep.subr.mxu0 0.0
      %1087 = vmatpush1.msra.mxu0 0.0
      %1088 = vmatprep.subr.mxu0 0.0
      %1089 = vmatpush1.msra.mxu0 0.0
      %1090 = vmatprep.subr.mxu0 0.0
      %1091 = vmatpush1.msra.mxu0 0.0
      %1092 = vmatprep.subr.mxu0 0.0
      %1093 = vmatpush1.msra.mxu0 0.0
      %1094 = vmatprep.subr.mxu0 0.0
      %1095 = vmatpush1.msra.mxu0 0.0
      %1096 = vmatprep.subr.mxu0 0.0
      %1097 = vmatpush1.msra.mxu0 0.0
      %1098 = vmatprep.subr.mxu0 0.0
      %1099 = vmatpush1.msra.mxu0 0.0
      %1100 = vmatprep.subr.mxu0 0.0
      %1101 = vmatpush1.msra.mxu0 0.0
      %1102 = vmatprep.subr.mxu0 0.0
      %1103 = vmatpush1.msra.mxu0 0.0
      %1104 = vmatprep.subr.mxu0 0.0
      %1105 = vmatpush1.msra.mxu0 0.0
      %1106 = vmatprep.mubr.f32.mxu0 0.0
      %1107 = vmatmul.mubr.f32.gmra.mrb[0].mxu0 %v1034
      %v1108 = vpop.f32.mrb[0].mxu0
      %v1109 = vadd.f32 0.0, %v1108
      %v1110 = vpop.f32.mrb[0].mxu0
      %v1111 = vadd.f32 0.0, %v1110
      %1112 = vdwg.mxu0
      %v1113 = vadd.f32 %v1013, %v1109
      %v1114 = vadd.f32 %v1014, %v1111
      %1115 = vrot.lane.b32.xlu0 %v430, 112
      %v1116 = vpop.permute.xlu0 %1115
      %1117 = vrot.lane.b32.xlu0 %v432, 112
      %v1118 = vpop.permute.xlu0 %1117
      %vm1119 = vcmp.lt.s32.totalorder %v439, 112
      %v1120 = vsel %vm1119, %v1116, %v1118
      %v1121 = vsel %vm1119, %v1118, %v1116
      %v1122 = vlaneseq
      %v1123 = vshrl.u32 %v1122, 7
      %v1124 = vsub.s32 7, %v1123
      %v1125 = vrot.slane %v414, %v1124
      %v1126 = vlaneseq
      %v1127 = vshrl.u32 %v1126, 7
      %v1128 = vsub.s32 7, %v1127
      %v1129 = vrot.slane %v415, %v1128
      %v1130 = vmul.f32 %v1120, %v1125
      %v1131 = vmul.f32 %v1121, %v1129
      %v1132 = vld [vmem:[%s2 + $0x38] sm:$0xff]
      %v1134 = vsel %vm472, %v1132, 0
      %v1137 = vsel %vm476, %v1130, 0
      %v1140 = vsel %vm476, %v1131, 0
      %1142 = vmatprep.subr.mxu0 %v1140
      %1143 = vmatpush1.msra.mxu0 %v1137
      %1144 = vmatprep.subr.mxu0 0.0
      %1145 = vmatpush1.msra.mxu0 0.0
      %1146 = vmatprep.subr.mxu0 0.0
      %1147 = vmatpush1.msra.mxu0 0.0
      %1148 = vmatprep.subr.mxu0 0.0
      %1149 = vmatpush1.msra.mxu0 0.0
      %1150 = vmatprep.subr.mxu0 0.0
      %1151 = vmatpush1.msra.mxu0 0.0
      %1152 = vmatprep.subr.mxu0 0.0
      %1153 = vmatpush1.msra.mxu0 0.0
      %1154 = vmatprep.subr.mxu0 0.0
      %1155 = vmatpush1.msra.mxu0 0.0
      %1156 = vmatprep.subr.mxu0 0.0
      %1157 = vmatpush1.msra.mxu0 0.0
      %1158 = vmatprep.subr.mxu0 0.0
      %1159 = vmatpush1.msra.mxu0 0.0
      %1160 = vmatprep.subr.mxu0 0.0
      %1161 = vmatpush1.msra.mxu0 0.0
      %1162 = vmatprep.subr.mxu0 0.0
      %1163 = vmatpush1.msra.mxu0 0.0
      %1164 = vmatprep.subr.mxu0 0.0
      %1165 = vmatpush1.msra.mxu0 0.0
      %1166 = vmatprep.subr.mxu0 0.0
      %1167 = vmatpush1.msra.mxu0 0.0
      %1168 = vmatprep.subr.mxu0 0.0
      %1169 = vmatpush1.msra.mxu0 0.0
      %1170 = vmatprep.subr.mxu0 0.0
      %1171 = vmatpush1.msra.mxu0 0.0
      %1172 = vmatprep.subr.mxu0 0.0
      %1173 = vmatpush1.msra.mxu0 0.0
      %1174 = vmatprep.subr.mxu0 0.0
      %1175 = vmatpush1.msra.mxu0 0.0
      %1176 = vmatprep.subr.mxu0 0.0
      %1177 = vmatpush1.msra.mxu0 0.0
      %1178 = vmatprep.subr.mxu0 0.0
      %1179 = vmatpush1.msra.mxu0 0.0
      %1180 = vmatprep.subr.mxu0 0.0
      %1181 = vmatpush1.msra.mxu0 0.0
      %1182 = vmatprep.subr.mxu0 0.0
      %1183 = vmatpush1.msra.mxu0 0.0
      %1184 = vmatprep.subr.mxu0 0.0
      %1185 = vmatpush1.msra.mxu0 0.0
      %1186 = vmatprep.subr.mxu0 0.0
      %1187 = vmatpush1.msra.mxu0 0.0
      %1188 = vmatprep.subr.mxu0 0.0
      %1189 = vmatpush1.msra.mxu0 0.0
      %1190 = vmatprep.subr.mxu0 0.0
      %1191 = vmatpush1.msra.mxu0 0.0
      %1192 = vmatprep.subr.mxu0 0.0
      %1193 = vmatpush1.msra.mxu0 0.0
      %1194 = vmatprep.subr.mxu0 0.0
      %1195 = vmatpush1.msra.mxu0 0.0
      %1196 = vmatprep.subr.mxu0 0.0
      %1197 = vmatpush1.msra.mxu0 0.0
      %1198 = vmatprep.subr.mxu0 0.0
      %1199 = vmatpush1.msra.mxu0 0.0
      %1200 = vmatprep.subr.mxu0 0.0
      %1201 = vmatpush1.msra.mxu0 0.0
      %1202 = vmatprep.subr.mxu0 0.0
      %1203 = vmatpush1.msra.mxu0 0.0
      %1204 = vmatprep.subr.mxu0 0.0
      %1205 = vmatpush1.msra.mxu0 0.0
      %1206 = vmatprep.mubr.f32.mxu0 0.0
      %1207 = vmatmul.mubr.f32.gmra.mrb[0].mxu0 %v1134
      %v1208 = vpop.f32.mrb[0].mxu0
      %v1209 = vadd.f32 0.0, %v1208
      %v1210 = vpop.f32.mrb[0].mxu0
      %v1211 = vadd.f32 0.0, %v1210
      %1212 = vdwg.mxu0
      %v1213 = vadd.f32 %v1113, %v1209
      %v1214 = vadd.f32 %v1114, %v1211
      %1215 = vrot.lane.b32.xlu0 %v430, 111
      %v1216 = vpop.permute.xlu0 %1215
      %1217 = vrot.lane.b32.xlu0 %v432, 111
      %v1218 = vpop.permute.xlu0 %1217
      %vm1219 = vcmp.lt.s32.totalorder %v439, 111
      %v1220 = vsel %vm1219, %v1216, %v1218
      %v1221 = vsel %vm1219, %v1218, %v1216
      %v1222 = vlaneseq
      %v1223 = vshrl.u32 %v1222, 7
      %v1224 = vsub.s32 0, %v1223
      %v1225 = vrot.slane %v416, %v1224
      %v1226 = vlaneseq
      %v1227 = vshrl.u32 %v1226, 7
      %v1228 = vsub.s32 0, %v1227
      %v1229 = vrot.slane %v417, %v1228
      %v1230 = vmul.f32 %v1220, %v1225
      %v1231 = vmul.f32 %v1221, %v1229
      %v1232 = vld [vmem:[%s2 + $0x40] sm:$0xff]
      %v1234 = vsel %vm472, %v1232, 0
      %v1237 = vsel %vm476, %v1230, 0
      %v1240 = vsel %vm476, %v1231, 0
      %1242 = vmatprep.subr.mxu0 %v1240
      %1243 = vmatpush1.msra.mxu0 %v1237
      %1244 = vmatprep.subr.mxu0 0.0
      %1245 = vmatpush1.msra.mxu0 0.0
      %1246 = vmatprep.subr.mxu0 0.0
      %1247 = vmatpush1.msra.mxu0 0.0
      %1248 = vmatprep.subr.mxu0 0.0
      %1249 = vmatpush1.msra.mxu0 0.0
      %1250 = vmatprep.subr.mxu0 0.0
      %1251 = vmatpush1.msra.mxu0 0.0
      %1252 = vmatprep.subr.mxu0 0.0
      %1253 = vmatpush1.msra.mxu0 0.0
      %1254 = vmatprep.subr.mxu0 0.0
      %1255 = vmatpush1.msra.mxu0 0.0
      %1256 = vmatprep.subr.mxu0 0.0
      %1257 = vmatpush1.msra.mxu0 0.0
      %1258 = vmatprep.subr.mxu0 0.0
      %1259 = vmatpush1.msra.mxu0 0.0
      %1260 = vmatprep.subr.mxu0 0.0
      %1261 = vmatpush1.msra.mxu0 0.0
      %1262 = vmatprep.subr.mxu0 0.0
      %1263 = vmatpush1.msra.mxu0 0.0
      %1264 = vmatprep.subr.mxu0 0.0
      %1265 = vmatpush1.msra.mxu0 0.0
      %1266 = vmatprep.subr.mxu0 0.0
      %1267 = vmatpush1.msra.mxu0 0.0
      %1268 = vmatprep.subr.mxu0 0.0
      %1269 = vmatpush1.msra.mxu0 0.0
      %1270 = vmatprep.subr.mxu0 0.0
      %1271 = vmatpush1.msra.mxu0 0.0
      %1272 = vmatprep.subr.mxu0 0.0
      %1273 = vmatpush1.msra.mxu0 0.0
      %1274 = vmatprep.subr.mxu0 0.0
      %1275 = vmatpush1.msra.mxu0 0.0
      %1276 = vmatprep.subr.mxu0 0.0
      %1277 = vmatpush1.msra.mxu0 0.0
      %1278 = vmatprep.subr.mxu0 0.0
      %1279 = vmatpush1.msra.mxu0 0.0
      %1280 = vmatprep.subr.mxu0 0.0
      %1281 = vmatpush1.msra.mxu0 0.0
      %1282 = vmatprep.subr.mxu0 0.0
      %1283 = vmatpush1.msra.mxu0 0.0
      %1284 = vmatprep.subr.mxu0 0.0
      %1285 = vmatpush1.msra.mxu0 0.0
      %1286 = vmatprep.subr.mxu0 0.0
      %1287 = vmatpush1.msra.mxu0 0.0
      %1288 = vmatprep.subr.mxu0 0.0
      %1289 = vmatpush1.msra.mxu0 0.0
      %1290 = vmatprep.subr.mxu0 0.0
      %1291 = vmatpush1.msra.mxu0 0.0
      %1292 = vmatprep.subr.mxu0 0.0
      %1293 = vmatpush1.msra.mxu0 0.0
      %1294 = vmatprep.subr.mxu0 0.0
      %1295 = vmatpush1.msra.mxu0 0.0
      %1296 = vmatprep.subr.mxu0 0.0
      %1297 = vmatpush1.msra.mxu0 0.0
      %1298 = vmatprep.subr.mxu0 0.0
      %1299 = vmatpush1.msra.mxu0 0.0
      %1300 = vmatprep.subr.mxu0 0.0
      %1301 = vmatpush1.msra.mxu0 0.0
      %1302 = vmatprep.subr.mxu0 0.0
      %1303 = vmatpush1.msra.mxu0 0.0
      %1304 = vmatprep.subr.mxu0 0.0
      %1305 = vmatpush1.msra.mxu0 0.0
      %1306 = vmatprep.mubr.f32.mxu0 0.0
      %1307 = vmatmul.mubr.f32.gmra.mrb[0].mxu0 %v1234
      %v1308 = vpop.f32.mrb[0].mxu0
      %v1309 = vadd.f32 0.0, %v1308
      %v1310 = vpop.f32.mrb[0].mxu0
      %v1311 = vadd.f32 0.0, %v1310
      %1312 = vdwg.mxu0
      %v1313 = vadd.f32 %v1213, %v1309
      %v1314 = vadd.f32 %v1214, %v1311
      %1316 = vset.pattern.permute.xlu0 0
      %1317 = vperm.xlu0 %1316, %v418
      %v1318 = vpop.permute.xlu0 %1317
      %v1320 = vadd.f32 %v1313, %v1318
      %v1321 = vadd.f32 %v1314, %v1318
      %vm1322 = vcmp.ge.f32.partialorder %v1320, 0.0
      %vm1323 = vcmp.ge.f32.partialorder %v1321, 0.0
      %v1324 = vmul.f32 %v1320, 0.2
      %v1325 = vmul.f32 %v1321, 0.2
      %v1326 = vsel %vm1322, %v1320, %v1324
      %v1327 = vsel %vm1323, %v1321, %v1325
      %v1328 = vadd.f32 %v1326, %v1327
      %1329 = vadd.xlane.f32.xlu0 %v1328
      %v1330 = vpop.xlane.xlu0 %1329
      %v1331 = vrot.slane %v1330, 4
      %v1332 = vadd.f32 %v1330, %v1331
      %v1333 = vrot.slane %v1332, 2
      %v1334 = vadd.f32 %v1332, %v1333
      %v1335 = vrot.slane %v1334, 1
      %v1336 = vadd.f32 %v1334, %v1335
      %v1337 = vmul.f32 %v1336, 0.00048828125
      %v1338 = vsub.f32 %v1326, %v1337
      %v1339 = vsub.f32 %v1327, %v1337
      %v1340 = vmul.f32 %v1338, %v1338
      %v1341 = vmul.f32 %v1339, %v1339
      %v1342 = vadd.f32 %v1340, %v1341
      %1343 = vadd.xlane.f32.xlu0 %v1342
      %v1344 = vpop.xlane.xlu0 %1343
      %v1345 = vrot.slane %v1344, 4
      %v1346 = vadd.f32 %v1344, %v1345
      %v1347 = vrot.slane %v1346, 2
      %v1348 = vadd.f32 %v1346, %v1347
      %v1349 = vrot.slane %v1348, 1
      %v1350 = vadd.f32 %v1348, %v1349
      %v1351 = vmul.f32 %v1350, 0.00048828125
      %v1352 = vadd.f32 %v1351, 1e-05
      %v1353 = vrsqrt.pop %v1352
      %v1354 = vmul.f32 %v1338, %v1353
      %v1355 = vmul.f32 %v1339, %v1353
      %v1356 = vmul.f32 %v1354, %v421
      %v1357 = vmul.f32 %v1355, %v422
      %v1358 = vadd.f32 %v1356, %v423
      %v1359 = vadd.f32 %v1357, %v424
      %1360 = vrot.lane.b32.xlu0 %v1358, 17
      %v1361 = vpop.permute.xlu0 %1360
      %1362 = vrot.lane.b32.xlu0 %v1359, 17
      %v1363 = vpop.permute.xlu0 %1362
      %v1364 = vsel %vm440, %v1361, %v1363
      %v1365 = vsel %vm440, %v1363, %v1361
      %v1366 = vmul.f32 %v1365, %v446
      %v1367 = vmul.f32 %v1364, %v450
      %v1368 = vld [vmem:[%s6] sm:$0xff]
      %1369 = vrot.lane.b32.xlu0 %v1358, 16
      %v1370 = vpop.permute.xlu0 %1369
      %1371 = vrot.lane.b32.xlu0 %v1359, 16
      %v1372 = vpop.permute.xlu0 %1371
      %v1373 = vsel %vm458, %v1370, %v1372
      %v1374 = vsel %vm458, %v1372, %v1370
      %v1375 = vmul.f32 %v1374, %v464
      %v1376 = vmul.f32 %v1373, %v468
      %v1377 = vld [vmem:[%s6 + $0x8] sm:$0xff]
      %vm1378 = vcmask 64512
      %v1380 = vsel %vm1378, %v1377, 0
      %1382 = vmatprep.subr.mxu0 %v1376
      %1383 = vmatpush1.msra.mxu0 %v1375
      %1384 = vmatprep.subr.mxu0 0.0
      %1385 = vmatpush1.msra.mxu0 0.0
      %1386 = vmatprep.subr.mxu0 0.0
      %1387 = vmatpush1.msra.mxu0 0.0
      %1388 = vmatprep.subr.mxu0 0.0
      %1389 = vmatpush1.msra.mxu0 0.0
      %1390 = vmatprep.subr.mxu0 0.0
      %1391 = vmatpush1.msra.mxu0 0.0
      %1392 = vmatprep.subr.mxu0 0.0
      %1393 = vmatpush1.msra.mxu0 0.0
      %1394 = vmatprep.subr.mxu0 0.0
      %1395 = vmatpush1.msra.mxu0 0.0
      %1396 = vmatprep.subr.mxu0 0.0
      %1397 = vmatpush1.msra.mxu0 0.0
      %1398 = vmatprep.subr.mxu0 0.0
      %1399 = vmatpush1.msra.mxu0 0.0
      %1400 = vmatprep.subr.mxu0 0.0
      %1401 = vmatpush1.msra.mxu0 0.0
      %1402 = vmatprep.subr.mxu0 0.0
      %1403 = vmatpush1.msra.mxu0 0.0
      %1404 = vmatprep.subr.mxu0 0.0
      %1405 = vmatpush1.msra.mxu0 0.0
      %1406 = vmatprep.subr.mxu0 0.0
      %1407 = vmatpush1.msra.mxu0 0.0
      %1408 = vmatprep.subr.mxu0 0.0
      %1409 = vmatpush1.msra.mxu0 0.0
      %1410 = vmatprep.subr.mxu0 0.0
      %1411 = vmatpush1.msra.mxu0 0.0
      %1412 = vmatprep.subr.mxu0 0.0
      %1413 = vmatpush1.msra.mxu0 0.0
      %1414 = vmatprep.subr.mxu0 0.0
      %1415 = vmatpush1.msra.mxu0 0.0
      %1416 = vmatprep.subr.mxu0 0.0
      %1417 = vmatpush1.msra.mxu0 0.0
      %1418 = vmatprep.subr.mxu0 0.0
      %1419 = vmatpush1.msra.mxu0 0.0
      %1420 = vmatprep.subr.mxu0 0.0
      %1421 = vmatpush1.msra.mxu0 0.0
      %1422 = vmatprep.subr.mxu0 0.0
      %1423 = vmatpush1.msra.mxu0 0.0
      %1424 = vmatprep.subr.mxu0 0.0
      %1425 = vmatpush1.msra.mxu0 0.0
      %1426 = vmatprep.subr.mxu0 0.0
      %1427 = vmatpush1.msra.mxu0 0.0
      %1428 = vmatprep.subr.mxu0 0.0
      %1429 = vmatpush1.msra.mxu0 0.0
      %1430 = vmatprep.subr.mxu0 0.0
      %1431 = vmatpush1.msra.mxu0 0.0
      %1432 = vmatprep.subr.mxu0 0.0
      %1433 = vmatpush1.msra.mxu0 0.0
      %1434 = vmatprep.subr.mxu0 0.0
      %1435 = vmatpush1.msra.mxu0 0.0
      %1436 = vmatprep.subr.mxu0 0.0
      %1437 = vmatpush1.msra.mxu0 0.0
      %1438 = vmatprep.subr.mxu0 0.0
      %1439 = vmatpush1.msra.mxu0 0.0
      %1440 = vmatprep.subr.mxu0 0.0
      %1441 = vmatpush1.msra.mxu0 0.0
      %1442 = vmatprep.subr.mxu0 0.0
      %1443 = vmatpush1.msra.mxu0 0.0
      %1444 = vmatprep.subr.mxu0 0.0
      %1445 = vmatpush1.msra.mxu0 0.0
      %1446 = vmatprep.mubr.f32.mxu0 0.0
      %1447 = vmatmul.mubr.f32.gmra.mrb[0].mxu0 %v1380
      %v1448 = vpop.f32.mrb[0].mxu0
      %v1449 = vadd.f32 0.0, %v1448
      %v1450 = vpop.f32.mrb[0].mxu0
      %v1451 = vadd.f32 0.0, %v1450
      %1452 = vdwg.mxu0
      %v1454 = vsel %vm1378, %v1368, 0
      %1456 = vmatprep.subr.mxu0 %v1367
      %1457 = vmatpush1.msra.mxu0 %v1366
      %1458 = vmatprep.subr.mxu0 0.0
      %1459 = vmatpush1.msra.mxu0 0.0
      %1460 = vmatprep.subr.mxu0 0.0
      %1461 = vmatpush1.msra.mxu0 0.0
      %1462 = vmatprep.subr.mxu0 0.0
      %1463 = vmatpush1.msra.mxu0 0.0
      %1464 = vmatprep.subr.mxu0 0.0
      %1465 = vmatpush1.msra.mxu0 0.0
      %1466 = vmatprep.subr.mxu0 0.0
      %1467 = vmatpush1.msra.mxu0 0.0
      %1468 = vmatprep.subr.mxu0 0.0
      %1469 = vmatpush1.msra.mxu0 0.0
      %1470 = vmatprep.subr.mxu0 0.0
      %1471 = vmatpush1.msra.mxu0 0.0
      %1472 = vmatprep.subr.mxu0 0.0
      %1473 = vmatpush1.msra.mxu0 0.0
      %1474 = vmatprep.subr.mxu0 0.0
      %1475 = vmatpush1.msra.mxu0 0.0
      %1476 = vmatprep.subr.mxu0 0.0
      %1477 = vmatpush1.msra.mxu0 0.0
      %1478 = vmatprep.subr.mxu0 0.0
      %1479 = vmatpush1.msra.mxu0 0.0
      %1480 = vmatprep.subr.mxu0 0.0
      %1481 = vmatpush1.msra.mxu0 0.0
      %1482 = vmatprep.subr.mxu0 0.0
      %1483 = vmatpush1.msra.mxu0 0.0
      %1484 = vmatprep.subr.mxu0 0.0
      %1485 = vmatpush1.msra.mxu0 0.0
      %1486 = vmatprep.subr.mxu0 0.0
      %1487 = vmatpush1.msra.mxu0 0.0
      %1488 = vmatprep.subr.mxu0 0.0
      %1489 = vmatpush1.msra.mxu0 0.0
      %1490 = vmatprep.subr.mxu0 0.0
      %1491 = vmatpush1.msra.mxu0 0.0
      %1492 = vmatprep.subr.mxu0 0.0
      %1493 = vmatpush1.msra.mxu0 0.0
      %1494 = vmatprep.subr.mxu0 0.0
      %1495 = vmatpush1.msra.mxu0 0.0
      %1496 = vmatprep.subr.mxu0 0.0
      %1497 = vmatpush1.msra.mxu0 0.0
      %1498 = vmatprep.subr.mxu0 0.0
      %1499 = vmatpush1.msra.mxu0 0.0
      %1500 = vmatprep.subr.mxu0 0.0
      %1501 = vmatpush1.msra.mxu0 0.0
      %1502 = vmatprep.subr.mxu0 0.0
      %1503 = vmatpush1.msra.mxu0 0.0
      %1504 = vmatprep.subr.mxu0 0.0
      %1505 = vmatpush1.msra.mxu0 0.0
      %1506 = vmatprep.subr.mxu0 0.0
      %1507 = vmatpush1.msra.mxu0 0.0
      %1508 = vmatprep.subr.mxu0 0.0
      %1509 = vmatpush1.msra.mxu0 0.0
      %1510 = vmatprep.subr.mxu0 0.0
      %1511 = vmatpush1.msra.mxu0 0.0
      %1512 = vmatprep.subr.mxu0 0.0
      %1513 = vmatpush1.msra.mxu0 0.0
      %1514 = vmatprep.subr.mxu0 0.0
      %1515 = vmatpush1.msra.mxu0 0.0
      %1516 = vmatprep.subr.mxu0 0.0
      %1517 = vmatpush1.msra.mxu0 0.0
      %1518 = vmatprep.subr.mxu0 0.0
      %1519 = vmatpush1.msra.mxu0 0.0
      %1520 = vmatprep.mubr.f32.mxu0 0.0
      %1521 = vmatmul.mubr.f32.gmra.mrb[0].mxu0 %v1454
      %v1522 = vpop.f32.mrb[0].mxu0
      %v1523 = vadd.f32 %v1449, %v1522
      %v1524 = vpop.f32.mrb[0].mxu0
      %v1525 = vadd.f32 %v1451, %v1524
      %1526 = vdwg.mxu0
      %1527 = vrot.lane.b32.xlu0 %v1358, 15
      %v1528 = vpop.permute.xlu0 %1527
      %1529 = vrot.lane.b32.xlu0 %v1359, 15
      %v1530 = vpop.permute.xlu0 %1529
      %v1531 = vsel %vm638, %v1528, %v1530
      %v1532 = vsel %vm638, %v1530, %v1528
      %v1533 = vmul.f32 %v1532, %v644
      %v1534 = vmul.f32 %v1531, %v648
      %v1535 = vld [vmem:[%s6 + $0x10] sm:$0xff]
      %v1537 = vsel %vm1378, %v1535, 0
      %1539 = vmatprep.subr.mxu0 %v1534
      %1540 = vmatpush1.msra.mxu0 %v1533
      %1541 = vmatprep.subr.mxu0 0.0
      %1542 = vmatpush1.msra.mxu0 0.0
      %1543 = vmatprep.subr.mxu0 0.0
      %1544 = vmatpush1.msra.mxu0 0.0
      %1545 = vmatprep.subr.mxu0 0.0
      %1546 = vmatpush1.msra.mxu0 0.0
      %1547 = vmatprep.subr.mxu0 0.0
      %1548 = vmatpush1.msra.mxu0 0.0
      %1549 = vmatprep.subr.mxu0 0.0
      %1550 = vmatpush1.msra.mxu0 0.0
      %1551 = vmatprep.subr.mxu0 0.0
      %1552 = vmatpush1.msra.mxu0 0.0
      %1553 = vmatprep.subr.mxu0 0.0
      %1554 = vmatpush1.msra.mxu0 0.0
      %1555 = vmatprep.subr.mxu0 0.0
      %1556 = vmatpush1.msra.mxu0 0.0
      %1557 = vmatprep.subr.mxu0 0.0
      %1558 = vmatpush1.msra.mxu0 0.0
      %1559 = vmatprep.subr.mxu0 0.0
      %1560 = vmatpush1.msra.mxu0 0.0
      %1561 = vmatprep.subr.mxu0 0.0
      %1562 = vmatpush1.msra.mxu0 0.0
      %1563 = vmatprep.subr.mxu0 0.0
      %1564 = vmatpush1.msra.mxu0 0.0
      %1565 = vmatprep.subr.mxu0 0.0
      %1566 = vmatpush1.msra.mxu0 0.0
      %1567 = vmatprep.subr.mxu0 0.0
      %1568 = vmatpush1.msra.mxu0 0.0
      %1569 = vmatprep.subr.mxu0 0.0
      %1570 = vmatpush1.msra.mxu0 0.0
      %1571 = vmatprep.subr.mxu0 0.0
      %1572 = vmatpush1.msra.mxu0 0.0
      %1573 = vmatprep.subr.mxu0 0.0
      %1574 = vmatpush1.msra.mxu0 0.0
      %1575 = vmatprep.subr.mxu0 0.0
      %1576 = vmatpush1.msra.mxu0 0.0
      %1577 = vmatprep.subr.mxu0 0.0
      %1578 = vmatpush1.msra.mxu0 0.0
      %1579 = vmatprep.subr.mxu0 0.0
      %1580 = vmatpush1.msra.mxu0 0.0
      %1581 = vmatprep.subr.mxu0 0.0
      %1582 = vmatpush1.msra.mxu0 0.0
      %1583 = vmatprep.subr.mxu0 0.0
      %1584 = vmatpush1.msra.mxu0 0.0
      %1585 = vmatprep.subr.mxu0 0.0
      %1586 = vmatpush1.msra.mxu0 0.0
      %1587 = vmatprep.subr.mxu0 0.0
      %1588 = vmatpush1.msra.mxu0 0.0
      %1589 = vmatprep.subr.mxu0 0.0
      %1590 = vmatpush1.msra.mxu0 0.0
      %1591 = vmatprep.subr.mxu0 0.0
      %1592 = vmatpush1.msra.mxu0 0.0
      %1593 = vmatprep.subr.mxu0 0.0
      %1594 = vmatpush1.msra.mxu0 0.0
      %1595 = vmatprep.subr.mxu0 0.0
      %1596 = vmatpush1.msra.mxu0 0.0
      %1597 = vmatprep.subr.mxu0 0.0
      %1598 = vmatpush1.msra.mxu0 0.0
      %1599 = vmatprep.subr.mxu0 0.0
      %1600 = vmatpush1.msra.mxu0 0.0
      %1601 = vmatprep.subr.mxu0 0.0
      %1602 = vmatpush1.msra.mxu0 0.0
      %1603 = vmatprep.mubr.f32.mxu0 0.0
      %1604 = vmatmul.mubr.f32.gmra.mrb[0].mxu0 %v1537
      %v1605 = vpop.f32.mrb[0].mxu0
      %v1606 = vadd.f32 0.0, %v1605
      %v1607 = vpop.f32.mrb[0].mxu0
      %v1608 = vadd.f32 0.0, %v1607
      %1609 = vdwg.mxu0
      %v1610 = vadd.f32 %v1523, %v1606
      %v1611 = vadd.f32 %v1525, %v1608
      %1612 = vrot.lane.b32.xlu0 %v1358, 1
      %v1613 = vpop.permute.xlu0 %1612
      %1614 = vrot.lane.b32.xlu0 %v1359, 1
      %v1615 = vpop.permute.xlu0 %1614
      %v1616 = vsel %vm738, %v1613, %v1615
      %v1617 = vsel %vm738, %v1615, %v1613
      %v1618 = vmul.f32 %v1617, %v744
      %v1619 = vmul.f32 %v1616, %v748
      %v1620 = vld [vmem:[%s6 + $0x18] sm:$0xff]
      %v1622 = vsel %vm1378, %v1620, 0
      %1624 = vmatprep.subr.mxu0 %v1619
      %1625 = vmatpush1.msra.mxu0 %v1618
      %1626 = vmatprep.subr.mxu0 0.0
      %1627 = vmatpush1.msra.mxu0 0.0
      %1628 = vmatprep.subr.mxu0 0.0
      %1629 = vmatpush1.msra.mxu0 0.0
      %1630 = vmatprep.subr.mxu0 0.0
      %1631 = vmatpush1.msra.mxu0 0.0
      %1632 = vmatprep.subr.mxu0 0.0
      %1633 = vmatpush1.msra.mxu0 0.0
      %1634 = vmatprep.subr.mxu0 0.0
      %1635 = vmatpush1.msra.mxu0 0.0
      %1636 = vmatprep.subr.mxu0 0.0
      %1637 = vmatpush1.msra.mxu0 0.0
      %1638 = vmatprep.subr.mxu0 0.0
      %1639 = vmatpush1.msra.mxu0 0.0
      %1640 = vmatprep.subr.mxu0 0.0
      %1641 = vmatpush1.msra.mxu0 0.0
      %1642 = vmatprep.subr.mxu0 0.0
      %1643 = vmatpush1.msra.mxu0 0.0
      %1644 = vmatprep.subr.mxu0 0.0
      %1645 = vmatpush1.msra.mxu0 0.0
      %1646 = vmatprep.subr.mxu0 0.0
      %1647 = vmatpush1.msra.mxu0 0.0
      %1648 = vmatprep.subr.mxu0 0.0
      %1649 = vmatpush1.msra.mxu0 0.0
      %1650 = vmatprep.subr.mxu0 0.0
      %1651 = vmatpush1.msra.mxu0 0.0
      %1652 = vmatprep.subr.mxu0 0.0
      %1653 = vmatpush1.msra.mxu0 0.0
      %1654 = vmatprep.subr.mxu0 0.0
      %1655 = vmatpush1.msra.mxu0 0.0
      %1656 = vmatprep.subr.mxu0 0.0
      %1657 = vmatpush1.msra.mxu0 0.0
      %1658 = vmatprep.subr.mxu0 0.0
      %1659 = vmatpush1.msra.mxu0 0.0
      %1660 = vmatprep.subr.mxu0 0.0
      %1661 = vmatpush1.msra.mxu0 0.0
      %1662 = vmatprep.subr.mxu0 0.0
      %1663 = vmatpush1.msra.mxu0 0.0
      %1664 = vmatprep.subr.mxu0 0.0
      %1665 = vmatpush1.msra.mxu0 0.0
      %1666 = vmatprep.subr.mxu0 0.0
      %1667 = vmatpush1.msra.mxu0 0.0
      %1668 = vmatprep.subr.mxu0 0.0
      %1669 = vmatpush1.msra.mxu0 0.0
      %1670 = vmatprep.subr.mxu0 0.0
      %1671 = vmatpush1.msra.mxu0 0.0
      %1672 = vmatprep.subr.mxu0 0.0
      %1673 = vmatpush1.msra.mxu0 0.0
      %1674 = vmatprep.subr.mxu0 0.0
      %1675 = vmatpush1.msra.mxu0 0.0
      %1676 = vmatprep.subr.mxu0 0.0
      %1677 = vmatpush1.msra.mxu0 0.0
      %1678 = vmatprep.subr.mxu0 0.0
      %1679 = vmatpush1.msra.mxu0 0.0
      %1680 = vmatprep.subr.mxu0 0.0
      %1681 = vmatpush1.msra.mxu0 0.0
      %1682 = vmatprep.subr.mxu0 0.0
      %1683 = vmatpush1.msra.mxu0 0.0
      %1684 = vmatprep.subr.mxu0 0.0
      %1685 = vmatpush1.msra.mxu0 0.0
      %1686 = vmatprep.subr.mxu0 0.0
      %1687 = vmatpush1.msra.mxu0 0.0
      %1688 = vmatprep.mubr.f32.mxu0 0.0
      %1689 = vmatmul.mubr.f32.gmra.mrb[0].mxu0 %v1622
      %v1690 = vpop.f32.mrb[0].mxu0
      %v1691 = vadd.f32 0.0, %v1690
      %v1692 = vpop.f32.mrb[0].mxu0
      %v1693 = vadd.f32 0.0, %v1692
      %1694 = vdwg.mxu0
      %v1695 = vadd.f32 %v1610, %v1691
      %v1696 = vadd.f32 %v1611, %v1693
      %v1697 = vld [vmem:[%s6 + $0x20] sm:$0xff]
      %v1699 = vsel %vm1378, %v1697, 0
      %1701 = vmatprep.subr.mxu0 %v1359
      %1702 = vmatpush1.msra.mxu0 %v1358
      %1703 = vmatprep.subr.mxu0 0.0
      %1704 = vmatpush1.msra.mxu0 0.0
      %1705 = vmatprep.subr.mxu0 0.0
      %1706 = vmatpush1.msra.mxu0 0.0
      %1707 = vmatprep.subr.mxu0 0.0
      %1708 = vmatpush1.msra.mxu0 0.0
      %1709 = vmatprep.subr.mxu0 0.0
      %1710 = vmatpush1.msra.mxu0 0.0
      %1711 = vmatprep.subr.mxu0 0.0
      %1712 = vmatpush1.msra.mxu0 0.0
      %1713 = vmatprep.subr.mxu0 0.0
      %1714 = vmatpush1.msra.mxu0 0.0
      %1715 = vmatprep.subr.mxu0 0.0
      %1716 = vmatpush1.msra.mxu0 0.0
      %1717 = vmatprep.subr.mxu0 0.0
      %1718 = vmatpush1.msra.mxu0 0.0
      %1719 = vmatprep.subr.mxu0 0.0
      %1720 = vmatpush1.msra.mxu0 0.0
      %1721 = vmatprep.subr.mxu0 0.0
      %1722 = vmatpush1.msra.mxu0 0.0
      %1723 = vmatprep.subr.mxu0 0.0
      %1724 = vmatpush1.msra.mxu0 0.0
      %1725 = vmatprep.subr.mxu0 0.0
      %1726 = vmatpush1.msra.mxu0 0.0
      %1727 = vmatprep.subr.mxu0 0.0
      %1728 = vmatpush1.msra.mxu0 0.0
      %1729 = vmatprep.subr.mxu0 0.0
      %1730 = vmatpush1.msra.mxu0 0.0
      %1731 = vmatprep.subr.mxu0 0.0
      %1732 = vmatpush1.msra.mxu0 0.0
      %1733 = vmatprep.subr.mxu0 0.0
      %1734 = vmatpush1.msra.mxu0 0.0
      %1735 = vmatprep.subr.mxu0 0.0
      %1736 = vmatpush1.msra.mxu0 0.0
      %1737 = vmatprep.subr.mxu0 0.0
      %1738 = vmatpush1.msra.mxu0 0.0
      %1739 = vmatprep.subr.mxu0 0.0
      %1740 = vmatpush1.msra.mxu0 0.0
      %1741 = vmatprep.subr.mxu0 0.0
      %1742 = vmatpush1.msra.mxu0 0.0
      %1743 = vmatprep.subr.mxu0 0.0
      %1744 = vmatpush1.msra.mxu0 0.0
      %1745 = vmatprep.subr.mxu0 0.0
      %1746 = vmatpush1.msra.mxu0 0.0
      %1747 = vmatprep.subr.mxu0 0.0
      %1748 = vmatpush1.msra.mxu0 0.0
      %1749 = vmatprep.subr.mxu0 0.0
      %1750 = vmatpush1.msra.mxu0 0.0
      %1751 = vmatprep.subr.mxu0 0.0
      %1752 = vmatpush1.msra.mxu0 0.0
      %1753 = vmatprep.subr.mxu0 0.0
      %1754 = vmatpush1.msra.mxu0 0.0
      %1755 = vmatprep.subr.mxu0 0.0
      %1756 = vmatpush1.msra.mxu0 0.0
      %1757 = vmatprep.subr.mxu0 0.0
      %1758 = vmatpush1.msra.mxu0 0.0
      %1759 = vmatprep.subr.mxu0 0.0
      %1760 = vmatpush1.msra.mxu0 0.0
      %1761 = vmatprep.subr.mxu0 0.0
      %1762 = vmatpush1.msra.mxu0 0.0
      %1763 = vmatprep.subr.mxu0 0.0
      %1764 = vmatpush1.msra.mxu0 0.0
      %1765 = vmatprep.mubr.f32.mxu0 0.0
      %1766 = vmatmul.mubr.f32.gmra.mrb[0].mxu0 %v1699
      %v1767 = vpop.f32.mrb[0].mxu0
      %v1768 = vadd.f32 0.0, %v1767
      %v1769 = vpop.f32.mrb[0].mxu0
      %v1770 = vadd.f32 0.0, %v1769
      %1771 = vdwg.mxu0
      %v1772 = vadd.f32 %v1695, %v1768
      %v1773 = vadd.f32 %v1696, %v1770
      %1774 = vrot.lane.b32.xlu0 %v1358, 127
      %v1775 = vpop.permute.xlu0 %1774
      %1776 = vrot.lane.b32.xlu0 %v1359, 127
      %v1777 = vpop.permute.xlu0 %1776
      %v1778 = vsel %vm919, %v1775, %v1777
      %v1779 = vsel %vm919, %v1777, %v1775
      %v1780 = vmul.f32 %v1778, %v925
      %v1781 = vmul.f32 %v1779, %v929
      %v1782 = vld [vmem:[%s6 + $0x28] sm:$0xff]
      %v1784 = vsel %vm1378, %v1782, 0
      %1786 = vmatprep.subr.mxu0 %v1781
      %1787 = vmatpush1.msra.mxu0 %v1780
      %1788 = vmatprep.subr.mxu0 0.0
      %1789 = vmatpush1.msra.mxu0 0.0
      %1790 = vmatprep.subr.mxu0 0.0
      %1791 = vmatpush1.msra.mxu0 0.0
      %1792 = vmatprep.subr.mxu0 0.0
      %1793 = vmatpush1.msra.mxu0 0.0
      %1794 = vmatprep.subr.mxu0 0.0
      %1795 = vmatpush1.msra.mxu0 0.0
      %1796 = vmatprep.subr.mxu0 0.0
      %1797 = vmatpush1.msra.mxu0 0.0
      %1798 = vmatprep.subr.mxu0 0.0
      %1799 = vmatpush1.msra.mxu0 0.0
      %1800 = vmatprep.subr.mxu0 0.0
      %1801 = vmatpush1.msra.mxu0 0.0
      %1802 = vmatprep.subr.mxu0 0.0
      %1803 = vmatpush1.msra.mxu0 0.0
      %1804 = vmatprep.subr.mxu0 0.0
      %1805 = vmatpush1.msra.mxu0 0.0
      %1806 = vmatprep.subr.mxu0 0.0
      %1807 = vmatpush1.msra.mxu0 0.0
      %1808 = vmatprep.subr.mxu0 0.0
      %1809 = vmatpush1.msra.mxu0 0.0
      %1810 = vmatprep.subr.mxu0 0.0
      %1811 = vmatpush1.msra.mxu0 0.0
      %1812 = vmatprep.subr.mxu0 0.0
      %1813 = vmatpush1.msra.mxu0 0.0
      %1814 = vmatprep.subr.mxu0 0.0
      %1815 = vmatpush1.msra.mxu0 0.0
      %1816 = vmatprep.subr.mxu0 0.0
      %1817 = vmatpush1.msra.mxu0 0.0
      %1818 = vmatprep.subr.mxu0 0.0
      %1819 = vmatpush1.msra.mxu0 0.0
      %1820 = vmatprep.subr.mxu0 0.0
      %1821 = vmatpush1.msra.mxu0 0.0
      %1822 = vmatprep.subr.mxu0 0.0
      %1823 = vmatpush1.msra.mxu0 0.0
      %1824 = vmatprep.subr.mxu0 0.0
      %1825 = vmatpush1.msra.mxu0 0.0
      %1826 = vmatprep.subr.mxu0 0.0
      %1827 = vmatpush1.msra.mxu0 0.0
      %1828 = vmatprep.subr.mxu0 0.0
      %1829 = vmatpush1.msra.mxu0 0.0
      %1830 = vmatprep.subr.mxu0 0.0
      %1831 = vmatpush1.msra.mxu0 0.0
      %1832 = vmatprep.subr.mxu0 0.0
      %1833 = vmatpush1.msra.mxu0 0.0
      %1834 = vmatprep.subr.mxu0 0.0
      %1835 = vmatpush1.msra.mxu0 0.0
      %1836 = vmatprep.subr.mxu0 0.0
      %1837 = vmatpush1.msra.mxu0 0.0
      %1838 = vmatprep.subr.mxu0 0.0
      %1839 = vmatpush1.msra.mxu0 0.0
      %1840 = vmatprep.subr.mxu0 0.0
      %1841 = vmatpush1.msra.mxu0 0.0
      %1842 = vmatprep.subr.mxu0 0.0
      %1843 = vmatpush1.msra.mxu0 0.0
      %1844 = vmatprep.subr.mxu0 0.0
      %1845 = vmatpush1.msra.mxu0 0.0
      %1846 = vmatprep.subr.mxu0 0.0
      %1847 = vmatpush1.msra.mxu0 0.0
      %1848 = vmatprep.subr.mxu0 0.0
      %1849 = vmatpush1.msra.mxu0 0.0
      %1850 = vmatprep.mubr.f32.mxu0 0.0
      %1851 = vmatmul.mubr.f32.gmra.mrb[0].mxu0 %v1784
      %v1852 = vpop.f32.mrb[0].mxu0
      %v1853 = vadd.f32 0.0, %v1852
      %v1854 = vpop.f32.mrb[0].mxu0
      %v1855 = vadd.f32 0.0, %v1854
      %1856 = vdwg.mxu0
      %v1857 = vadd.f32 %v1772, %v1853
      %v1858 = vadd.f32 %v1773, %v1855
      %1859 = vrot.lane.b32.xlu0 %v1358, 113
      %v1860 = vpop.permute.xlu0 %1859
      %1861 = vrot.lane.b32.xlu0 %v1359, 113
      %v1862 = vpop.permute.xlu0 %1861
      %v1863 = vsel %vm1019, %v1860, %v1862
      %v1864 = vsel %vm1019, %v1862, %v1860
      %v1865 = vmul.f32 %v1863, %v1025
      %v1866 = vmul.f32 %v1864, %v1029
      %v1867 = vld [vmem:[%s6 + $0x30] sm:$0xff]
      %v1869 = vsel %vm1378, %v1867, 0
      %1871 = vmatprep.subr.mxu0 %v1866
      %1872 = vmatpush1.msra.mxu0 %v1865
      %1873 = vmatprep.subr.mxu0 0.0
      %1874 = vmatpush1.msra.mxu0 0.0
      %1875 = vmatprep.subr.mxu0 0.0
      %1876 = vmatpush1.msra.mxu0 0.0
      %1877 = vmatprep.subr.mxu0 0.0
      %1878 = vmatpush1.msra.mxu0 0.0
      %1879 = vmatprep.subr.mxu0 0.0
      %1880 = vmatpush1.msra.mxu0 0.0
      %1881 = vmatprep.subr.mxu0 0.0
      %1882 = vmatpush1.msra.mxu0 0.0
      %1883 = vmatprep.subr.mxu0 0.0
      %1884 = vmatpush1.msra.mxu0 0.0
      %1885 = vmatprep.subr.mxu0 0.0
      %1886 = vmatpush1.msra.mxu0 0.0
      %1887 = vmatprep.subr.mxu0 0.0
      %1888 = vmatpush1.msra.mxu0 0.0
      %1889 = vmatprep.subr.mxu0 0.0
      %1890 = vmatpush1.msra.mxu0 0.0
      %1891 = vmatprep.subr.mxu0 0.0
      %1892 = vmatpush1.msra.mxu0 0.0
      %1893 = vmatprep.subr.mxu0 0.0
      %1894 = vmatpush1.msra.mxu0 0.0
      %1895 = vmatprep.subr.mxu0 0.0
      %1896 = vmatpush1.msra.mxu0 0.0
      %1897 = vmatprep.subr.mxu0 0.0
      %1898 = vmatpush1.msra.mxu0 0.0
      %1899 = vmatprep.subr.mxu0 0.0
      %1900 = vmatpush1.msra.mxu0 0.0
      %1901 = vmatprep.subr.mxu0 0.0
      %1902 = vmatpush1.msra.mxu0 0.0
      %1903 = vmatprep.subr.mxu0 0.0
      %1904 = vmatpush1.msra.mxu0 0.0
      %1905 = vmatprep.subr.mxu0 0.0
      %1906 = vmatpush1.msra.mxu0 0.0
      %1907 = vmatprep.subr.mxu0 0.0
      %1908 = vmatpush1.msra.mxu0 0.0
      %1909 = vmatprep.subr.mxu0 0.0
      %1910 = vmatpush1.msra.mxu0 0.0
      %1911 = vmatprep.subr.mxu0 0.0
      %1912 = vmatpush1.msra.mxu0 0.0
      %1913 = vmatprep.subr.mxu0 0.0
      %1914 = vmatpush1.msra.mxu0 0.0
      %1915 = vmatprep.subr.mxu0 0.0
      %1916 = vmatpush1.msra.mxu0 0.0
      %1917 = vmatprep.subr.mxu0 0.0
      %1918 = vmatpush1.msra.mxu0 0.0
      %1919 = vmatprep.subr.mxu0 0.0
      %1920 = vmatpush1.msra.mxu0 0.0
      %1921 = vmatprep.subr.mxu0 0.0
      %1922 = vmatpush1.msra.mxu0 0.0
      %1923 = vmatprep.subr.mxu0 0.0
      %1924 = vmatpush1.msra.mxu0 0.0
      %1925 = vmatprep.subr.mxu0 0.0
      %1926 = vmatpush1.msra.mxu0 0.0
      %1927 = vmatprep.subr.mxu0 0.0
      %1928 = vmatpush1.msra.mxu0 0.0
      %1929 = vmatprep.subr.mxu0 0.0
      %1930 = vmatpush1.msra.mxu0 0.0
      %1931 = vmatprep.subr.mxu0 0.0
      %1932 = vmatpush1.msra.mxu0 0.0
      %1933 = vmatprep.subr.mxu0 0.0
      %1934 = vmatpush1.msra.mxu0 0.0
      %1935 = vmatprep.mubr.f32.mxu0 0.0
      %1936 = vmatmul.mubr.f32.gmra.mrb[0].mxu0 %v1869
      %v1937 = vpop.f32.mrb[0].mxu0
      %v1938 = vadd.f32 0.0, %v1937
      %v1939 = vpop.f32.mrb[0].mxu0
      %v1940 = vadd.f32 0.0, %v1939
      %1941 = vdwg.mxu0
      %v1942 = vadd.f32 %v1857, %v1938
      %v1943 = vadd.f32 %v1858, %v1940
      %1944 = vrot.lane.b32.xlu0 %v1358, 112
      %v1945 = vpop.permute.xlu0 %1944
      %1946 = vrot.lane.b32.xlu0 %v1359, 112
      %v1947 = vpop.permute.xlu0 %1946
      %v1948 = vsel %vm1119, %v1945, %v1947
      %v1949 = vsel %vm1119, %v1947, %v1945
      %v1950 = vmul.f32 %v1948, %v1125
      %v1951 = vmul.f32 %v1949, %v1129
      %v1952 = vld [vmem:[%s6 + $0x38] sm:$0xff]
      %v1954 = vsel %vm1378, %v1952, 0
      %1956 = vmatprep.subr.mxu0 %v1951
      %1957 = vmatpush1.msra.mxu0 %v1950
      %1958 = vmatprep.subr.mxu0 0.0
      %1959 = vmatpush1.msra.mxu0 0.0
      %1960 = vmatprep.subr.mxu0 0.0
      %1961 = vmatpush1.msra.mxu0 0.0
      %1962 = vmatprep.subr.mxu0 0.0
      %1963 = vmatpush1.msra.mxu0 0.0
      %1964 = vmatprep.subr.mxu0 0.0
      %1965 = vmatpush1.msra.mxu0 0.0
      %1966 = vmatprep.subr.mxu0 0.0
      %1967 = vmatpush1.msra.mxu0 0.0
      %1968 = vmatprep.subr.mxu0 0.0
      %1969 = vmatpush1.msra.mxu0 0.0
      %1970 = vmatprep.subr.mxu0 0.0
      %1971 = vmatpush1.msra.mxu0 0.0
      %1972 = vmatprep.subr.mxu0 0.0
      %1973 = vmatpush1.msra.mxu0 0.0
      %1974 = vmatprep.subr.mxu0 0.0
      %1975 = vmatpush1.msra.mxu0 0.0
      %1976 = vmatprep.subr.mxu0 0.0
      %1977 = vmatpush1.msra.mxu0 0.0
      %1978 = vmatprep.subr.mxu0 0.0
      %1979 = vmatpush1.msra.mxu0 0.0
      %1980 = vmatprep.subr.mxu0 0.0
      %1981 = vmatpush1.msra.mxu0 0.0
      %1982 = vmatprep.subr.mxu0 0.0
      %1983 = vmatpush1.msra.mxu0 0.0
      %1984 = vmatprep.subr.mxu0 0.0
      %1985 = vmatpush1.msra.mxu0 0.0
      %1986 = vmatprep.subr.mxu0 0.0
      %1987 = vmatpush1.msra.mxu0 0.0
      %1988 = vmatprep.subr.mxu0 0.0
      %1989 = vmatpush1.msra.mxu0 0.0
      %1990 = vmatprep.subr.mxu0 0.0
      %1991 = vmatpush1.msra.mxu0 0.0
      %1992 = vmatprep.subr.mxu0 0.0
      %1993 = vmatpush1.msra.mxu0 0.0
      %1994 = vmatprep.subr.mxu0 0.0
      %1995 = vmatpush1.msra.mxu0 0.0
      %1996 = vmatprep.subr.mxu0 0.0
      %1997 = vmatpush1.msra.mxu0 0.0
      %1998 = vmatprep.subr.mxu0 0.0
      %1999 = vmatpush1.msra.mxu0 0.0
      %2000 = vmatprep.subr.mxu0 0.0
      %2001 = vmatpush1.msra.mxu0 0.0
      %2002 = vmatprep.subr.mxu0 0.0
      %2003 = vmatpush1.msra.mxu0 0.0
      %2004 = vmatprep.subr.mxu0 0.0
      %2005 = vmatpush1.msra.mxu0 0.0
      %2006 = vmatprep.subr.mxu0 0.0
      %2007 = vmatpush1.msra.mxu0 0.0
      %2008 = vmatprep.subr.mxu0 0.0
      %2009 = vmatpush1.msra.mxu0 0.0
      %2010 = vmatprep.subr.mxu0 0.0
      %2011 = vmatpush1.msra.mxu0 0.0
      %2012 = vmatprep.subr.mxu0 0.0
      %2013 = vmatpush1.msra.mxu0 0.0
      %2014 = vmatprep.subr.mxu0 0.0
      %2015 = vmatpush1.msra.mxu0 0.0
      %2016 = vmatprep.subr.mxu0 0.0
      %2017 = vmatpush1.msra.mxu0 0.0
      %2018 = vmatprep.subr.mxu0 0.0
      %2019 = vmatpush1.msra.mxu0 0.0
      %2020 = vmatprep.mubr.f32.mxu0 0.0
      %2021 = vmatmul.mubr.f32.gmra.mrb[0].mxu0 %v1954
      %v2022 = vpop.f32.mrb[0].mxu0
      %v2023 = vadd.f32 0.0, %v2022
      %v2024 = vpop.f32.mrb[0].mxu0
      %v2025 = vadd.f32 0.0, %v2024
      %2026 = vdwg.mxu0
      %v2027 = vadd.f32 %v1942, %v2023
      %v2028 = vadd.f32 %v1943, %v2025
      %2029 = vrot.lane.b32.xlu0 %v1358, 111
      %v2030 = vpop.permute.xlu0 %2029
      %2031 = vrot.lane.b32.xlu0 %v1359, 111
      %v2032 = vpop.permute.xlu0 %2031
      %v2033 = vsel %vm1219, %v2030, %v2032
      %v2034 = vsel %vm1219, %v2032, %v2030
      %v2035 = vmul.f32 %v2033, %v1225
      %v2036 = vmul.f32 %v2034, %v1229
      %v2037 = vld [vmem:[%s6 + $0x40] sm:$0xff]
      %v2039 = vsel %vm1378, %v2037, 0
      %2041 = vmatprep.subr.mxu0 %v2036
      %2042 = vmatpush1.msra.mxu0 %v2035
      %2043 = vmatprep.subr.mxu0 0.0
      %2044 = vmatpush1.msra.mxu0 0.0
      %2045 = vmatprep.subr.mxu0 0.0
      %2046 = vmatpush1.msra.mxu0 0.0
      %2047 = vmatprep.subr.mxu0 0.0
      %2048 = vmatpush1.msra.mxu0 0.0
      %2049 = vmatprep.subr.mxu0 0.0
      %2050 = vmatpush1.msra.mxu0 0.0
      %2051 = vmatprep.subr.mxu0 0.0
      %2052 = vmatpush1.msra.mxu0 0.0
      %2053 = vmatprep.subr.mxu0 0.0
      %2054 = vmatpush1.msra.mxu0 0.0
      %2055 = vmatprep.subr.mxu0 0.0
      %2056 = vmatpush1.msra.mxu0 0.0
      %2057 = vmatprep.subr.mxu0 0.0
      %2058 = vmatpush1.msra.mxu0 0.0
      %2059 = vmatprep.subr.mxu0 0.0
      %2060 = vmatpush1.msra.mxu0 0.0
      %2061 = vmatprep.subr.mxu0 0.0
      %2062 = vmatpush1.msra.mxu0 0.0
      %2063 = vmatprep.subr.mxu0 0.0
      %2064 = vmatpush1.msra.mxu0 0.0
      %2065 = vmatprep.subr.mxu0 0.0
      %2066 = vmatpush1.msra.mxu0 0.0
      %2067 = vmatprep.subr.mxu0 0.0
      %2068 = vmatpush1.msra.mxu0 0.0
      %2069 = vmatprep.subr.mxu0 0.0
      %2070 = vmatpush1.msra.mxu0 0.0
      %2071 = vmatprep.subr.mxu0 0.0
      %2072 = vmatpush1.msra.mxu0 0.0
      %2073 = vmatprep.subr.mxu0 0.0
      %2074 = vmatpush1.msra.mxu0 0.0
      %2075 = vmatprep.subr.mxu0 0.0
      %2076 = vmatpush1.msra.mxu0 0.0
      %2077 = vmatprep.subr.mxu0 0.0
      %2078 = vmatpush1.msra.mxu0 0.0
      %2079 = vmatprep.subr.mxu0 0.0
      %2080 = vmatpush1.msra.mxu0 0.0
      %2081 = vmatprep.subr.mxu0 0.0
      %2082 = vmatpush1.msra.mxu0 0.0
      %2083 = vmatprep.subr.mxu0 0.0
      %2084 = vmatpush1.msra.mxu0 0.0
      %2085 = vmatprep.subr.mxu0 0.0
      %2086 = vmatpush1.msra.mxu0 0.0
      %2087 = vmatprep.subr.mxu0 0.0
      %2088 = vmatpush1.msra.mxu0 0.0
      %2089 = vmatprep.subr.mxu0 0.0
      %2090 = vmatpush1.msra.mxu0 0.0
      %2091 = vmatprep.subr.mxu0 0.0
      %2092 = vmatpush1.msra.mxu0 0.0
      %2093 = vmatprep.subr.mxu0 0.0
      %2094 = vmatpush1.msra.mxu0 0.0
      %2095 = vmatprep.subr.mxu0 0.0
      %2096 = vmatpush1.msra.mxu0 0.0
      %2097 = vmatprep.subr.mxu0 0.0
      %2098 = vmatpush1.msra.mxu0 0.0
      %2099 = vmatprep.subr.mxu0 0.0
      %2100 = vmatpush1.msra.mxu0 0.0
      %2101 = vmatprep.subr.mxu0 0.0
      %2102 = vmatpush1.msra.mxu0 0.0
      %2103 = vmatprep.subr.mxu0 0.0
      %2104 = vmatpush1.msra.mxu0 0.0
      %2105 = vmatprep.mubr.f32.mxu0 0.0
      %2106 = vmatmul.mubr.f32.gmra.mrb[0].mxu0 %v2039
      %v2107 = vpop.f32.mrb[0].mxu0
      %v2108 = vadd.f32 0.0, %v2107
      %v2109 = vpop.f32.mrb[0].mxu0
      %v2110 = vadd.f32 0.0, %v2109
      %2111 = vdwg.mxu0
      %v2112 = vadd.f32 %v2027, %v2108
      %v2113 = vadd.f32 %v2028, %v2110
      %2115 = vset.pattern.permute.xlu0 0
      %2116 = vperm.xlu0 %2115, %v419
      %v2117 = vpop.permute.xlu0 %2116
      %v2119 = vadd.f32 %v2112, %v2117
      %v2120 = vadd.f32 %v2113, %v2117
      %vm2121 = vcmp.ge.f32.partialorder %v2119, 0.0
      %vm2122 = vcmp.ge.f32.partialorder %v2120, 0.0
      %v2123 = vmul.f32 %v2119, 0.2
      %v2124 = vmul.f32 %v2120, 0.2
      %v2125 = vsel %vm2121, %v2119, %v2123
      %v2126 = vsel %vm2122, %v2120, %v2124
      %v2127 = vadd.f32 %v2125, %v2126
      %2128 = vadd.xlane.f32.xlu0 %v2127
      %v2129 = vpop.xlane.xlu0 %2128
      %v2130 = vrot.slane %v2129, 4
      %v2131 = vadd.f32 %v2129, %v2130
      %v2132 = vrot.slane %v2131, 2
      %v2133 = vadd.f32 %v2131, %v2132
      %v2134 = vrot.slane %v2133, 1
      %v2135 = vadd.f32 %v2133, %v2134
      %v2136 = vmul.f32 %v2135, 0.00048828125
      %v2137 = vsub.f32 %v2125, %v2136
      %v2138 = vsub.f32 %v2126, %v2136
      %v2139 = vmul.f32 %v2137, %v2137
      %v2140 = vmul.f32 %v2138, %v2138
      %v2141 = vadd.f32 %v2139, %v2140
      %2142 = vadd.xlane.f32.xlu0 %v2141
      %v2143 = vpop.xlane.xlu0 %2142
      %v2144 = vrot.slane %v2143, 4
      %v2145 = vadd.f32 %v2143, %v2144
      %v2146 = vrot.slane %v2145, 2
      %v2147 = vadd.f32 %v2145, %v2146
      %v2148 = vrot.slane %v2147, 1
      %v2149 = vadd.f32 %v2147, %v2148
      %v2150 = vmul.f32 %v2149, 0.00048828125
      %v2151 = vadd.f32 %v2150, 1e-05
      %v2152 = vrsqrt.pop %v2151
      %v2153 = vmul.f32 %v2137, %v2152
      %v2154 = vmul.f32 %v2138, %v2152
      %v2155 = vmul.f32 %v2153, %v425
      %v2156 = vmul.f32 %v2154, %v426
      %v2157 = vadd.f32 %v2155, %v427
      %v2158 = vadd.f32 %v2156, %v428
      %2160 = vset.pattern.permute.xlu0 0
      %2161 = vperm.xlu0 %2160, %v420
      %v2162 = vpop.permute.xlu0 %2161
      %v2165 = vsel %vm1378, %v429, 0
      %2167 = vmatprep.subr.mxu0 %v2158
      %2168 = vmatpush1.msra.mxu0 %v2157
      %2169 = vmatprep.subr.mxu0 0.0
      %2170 = vmatpush1.msra.mxu0 0.0
      %2171 = vmatprep.subr.mxu0 0.0
      %2172 = vmatpush1.msra.mxu0 0.0
      %2173 = vmatprep.subr.mxu0 0.0
      %2174 = vmatpush1.msra.mxu0 0.0
      %2175 = vmatprep.subr.mxu0 0.0
      %2176 = vmatpush1.msra.mxu0 0.0
      %2177 = vmatprep.subr.mxu0 0.0
      %2178 = vmatpush1.msra.mxu0 0.0
      %2179 = vmatprep.subr.mxu0 0.0
      %2180 = vmatpush1.msra.mxu0 0.0
      %2181 = vmatprep.subr.mxu0 0.0
      %2182 = vmatpush1.msra.mxu0 0.0
      %2183 = vmatprep.subr.mxu0 0.0
      %2184 = vmatpush1.msra.mxu0 0.0
      %2185 = vmatprep.subr.mxu0 0.0
      %2186 = vmatpush1.msra.mxu0 0.0
      %2187 = vmatprep.subr.mxu0 0.0
      %2188 = vmatpush1.msra.mxu0 0.0
      %2189 = vmatprep.subr.mxu0 0.0
      %2190 = vmatpush1.msra.mxu0 0.0
      %2191 = vmatprep.subr.mxu0 0.0
      %2192 = vmatpush1.msra.mxu0 0.0
      %2193 = vmatprep.subr.mxu0 0.0
      %2194 = vmatpush1.msra.mxu0 0.0
      %2195 = vmatprep.subr.mxu0 0.0
      %2196 = vmatpush1.msra.mxu0 0.0
      %2197 = vmatprep.subr.mxu0 0.0
      %2198 = vmatpush1.msra.mxu0 0.0
      %2199 = vmatprep.subr.mxu0 0.0
      %2200 = vmatpush1.msra.mxu0 0.0
      %2201 = vmatprep.subr.mxu0 0.0
      %2202 = vmatpush1.msra.mxu0 0.0
      %2203 = vmatprep.subr.mxu0 0.0
      %2204 = vmatpush1.msra.mxu0 0.0
      %2205 = vmatprep.subr.mxu0 0.0
      %2206 = vmatpush1.msra.mxu0 0.0
      %2207 = vmatprep.subr.mxu0 0.0
      %2208 = vmatpush1.msra.mxu0 0.0
      %2209 = vmatprep.subr.mxu0 0.0
      %2210 = vmatpush1.msra.mxu0 0.0
      %2211 = vmatprep.subr.mxu0 0.0
      %2212 = vmatpush1.msra.mxu0 0.0
      %2213 = vmatprep.subr.mxu0 0.0
      %2214 = vmatpush1.msra.mxu0 0.0
      %2215 = vmatprep.subr.mxu0 0.0
      %2216 = vmatpush1.msra.mxu0 0.0
      %2217 = vmatprep.subr.mxu0 0.0
      %2218 = vmatpush1.msra.mxu0 0.0
      %2219 = vmatprep.subr.mxu0 0.0
      %2220 = vmatpush1.msra.mxu0 0.0
      %2221 = vmatprep.subr.mxu0 0.0
      %2222 = vmatpush1.msra.mxu0 0.0
      %2223 = vmatprep.subr.mxu0 0.0
      %2224 = vmatpush1.msra.mxu0 0.0
      %2225 = vmatprep.subr.mxu0 0.0
      %2226 = vmatpush1.msra.mxu0 0.0
      %2227 = vmatprep.subr.mxu0 0.0
      %2228 = vmatpush1.msra.mxu0 0.0
      %2229 = vmatprep.subr.mxu0 0.0
      %2230 = vmatpush1.msra.mxu0 0.0
      %2231 = vmatprep.mubr.f32.mxu0 0.0
      %2232 = vmatmul.mubr.f32.gmra.mrb[0].mxu0 %v2165
      %v2233 = vpop.f32.mrb[0].mxu0
      %v2234 = vadd.f32 %v2162, %v2233
      %v2235 = vpop.f32.mrb[0].mxu0
      %v2236 = vadd.f32 %v2162, %v2235
      %2237 = vdwg.mxu0
      %v2240 = vcombine.low %v2234, %v2236
      %2242 = vst [vmem:[%s413] sm:$0xff] %v2240
      %p2243 = scmp.lt.s32.totalorder %s23, 1
      %s2244 = scalar_select %p2243, %s23, 1
      %s2245 = smul.addr %s2244, 2
      %s2246 = smul.addr %s2245, 4
      %s2247 = scalar_lea.vmem %s12, %s2246
      // Predicated region
      $region69: #{noise_encoder_block.1} parent=67 // pred_check
        %p2248 = pneg %p298
      $region70: #{noise_encoder_block.1} parent=67 // pred_check_branch
        %2250 = sbr.rel (%p2248) target = $region72
      $region71: #{noise_encoder_block.1} parent=67 // pred_region
        _
      $region72: #{noise_encoder_block.1} parent=67 // pred_fallthru
        _
    $region68: #{noise_encoder_block.1} parent=5 // pred_fallthru
      _
    %p2251 = scmp.le.s32.totalorder 2, %s18
    // Predicated region
    $region73: #{noise_encoder_block.1} parent=5 // pred_check
      %p2252 = pneg %p2251
    $region74: #{noise_encoder_block.1} parent=5 // pred_check_branch
      %2254 = sbr.rel (%p2252) target = $region76
    $region75: #{noise_encoder_block.1} parent=5 // pred_region
      %s2255 = ssub.s32 %s18, 2
      // Predicated region
      $region77: #{noise_encoder_block.1} parent=75 // pred_check
        %p2256 = pneg %p304
      $region78: #{noise_encoder_block.1} parent=75 // pred_check_branch
        %2258 = sbr.rel (%p2256) target = $region80
      $region79: #{noise_encoder_block.1} parent=75 // pred_region
        %p2259 = scmp.lt.s32.totalorder %s24, 1
        %s2260 = scalar_select %p2259, %s24, 1
        %s2261 = smul.addr %s2260, 2
        %s2262 = smul.addr %s2261, 4
        %s2263 = scalar_lea.vmem %s12, %s2262
      $region80: #{noise_encoder_block.1} parent=75 // pred_fallthru
        _
    $region76: #{noise_encoder_block.1} parent=5 // pred_fallthru
      _
  $region6: #{noise_encoder_block.1} parent=0 // loop_footer
    %s22 = sadd.s32 1, %s18
  $region7: #{noise_encoder_block.1} parent=0 // loop_footer_branch
    %17 = sbr.rel target = $region3
  $region8: #{noise_encoder_block.1} parent=0 // loop_exit
    _

</llo_original>
